<compile_context>
chip_gen: v5e
topology: v5e:2x2
jax: 0.10.0
libtpu: 0.0.40
codegen_flags: <defaults>
</compile_context>

<pallas_src>
import functools

import numpy as np
import jax
import jax.numpy as jnp
from jax import lax
from jax.experimental import pallas as pl
from jax.experimental.pallas import tpu as pltpu


def _round_up(x, m):
    return (x + m - 1) // m * m


def _vmem_limit(blocks, slack=4 << 20, lo=16 << 20, hi=64 << 20):
    """Rough double-buffered VMEM footprint of (shape, dtype) blocks, clamped."""
    total = 0
    for shape, dtype in blocks:
        s = list(shape)
        if len(s) == 1:
            s = [1] + s
        n = 1
        for d in s[:-2]:
            n *= d
        n *= _round_up(s[-2], 8) * _round_up(s[-1], 128)
        total += 2 * n * np.dtype(dtype).itemsize        # x2: double buffering
    return int(min(max(total + slack, lo), hi))


# ---------------------------------------------------------------------------
# Pass 1: 3x3 "SAME" conv (bias-free) as ONE K=9*Cin MXU matmul + per-image
# per-channel sum / sum-of-squares (training-mode BatchNorm statistics).
# Grid: (B,), fully parallel (per-image partial stats, reduced in the wrapper).
# ---------------------------------------------------------------------------
def _conv3x3_stats_kernel(xp_ref, w1_ref, h_ref, sum_ref, sq_ref, *, H, W, W2p):
    # xp_ref : (1, H+3, W2p, Cin)  mxu dtype  zero-padded NHWC image, W2p % 8 == 0
    # w1_ref : (9*Cin, mid_p)      mxu dtype  (dy, dx, c)-major, pre-transposed
    # h_ref  : (1, H*W2p, mid_p)   mxu dtype  wide pre-BN conv activations
    # sum_ref: (1, 1, mid_p) f32   per-image channel sum   over valid columns
    # sq_ref : (1, 1, mid_p) f32   per-image channel sumsq over valid columns
    cin = xp_ref.shape[-1]
    HW2p = H * W2p

    # im2col LHS: lane-concat of the 9 shifted views -> a single K = 9*Cin matmul.
    parts = []
    for t in range(9):                               # statically unrolled 3x3 taps
        dy, dx = divmod(t, 3)
        # Slicing the (untiled) H axis is free; W2p % 8 == 0 makes the collapse
        # tile-preserving, so only the small dx in {1, 2} sublane shift costs anything.
        chunk = xp_ref[0, dy:dy + H + 1].astype(jnp.float32)
        chunk = chunk.reshape((H + 1) * W2p, cin)
        parts.append(chunk[dx:dx + HW2p])
    lhs = jnp.concatenate(parts, axis=-1)            # (HW2p, 9*Cin) f32

    acc = jnp.dot(lhs.astype(w1_ref.dtype), w1_ref[...],
                  preferred_element_type=jnp.float32)        # (HW2p, mid_p) f32
    h_ref[0] = acc.astype(h_ref.dtype)

    # BN statistics over valid columns only (wide columns x >= W are discarded later).
    col = lax.broadcasted_iota(jnp.int32, (H, W2p, 1), 1).reshape(HW2p, 1)
    mask = (col < W).astype(jnp.float32)
    am = acc * mask
    sum_ref[0] = jnp.sum(am, axis=0, keepdims=True)
    sq_ref[0] = jnp.sum(am * acc, axis=0, keepdims=True)


# ---------------------------------------------------------------------------
# Pass 2: fused BatchNorm (folded scale/shift) + LeakyReLU(0.1) + 1x1 conv.
# Grid: row tiles of N_wide = B*H*W2p; weights / per-channel vectors stay resident.
# ---------------------------------------------------------------------------
def _bn_lrelu_conv1x1_kernel(h_ref, scale_ref, shift_ref, w2_ref, b2_ref, out_ref):
    # h_ref    : (rt, mid_p)  mxu dtype
    # scale_ref: (1, mid_p)   f32   gamma * rsqrt(var + eps)
    # shift_ref: (1, mid_p)   f32   beta  - mean * scale
    # w2_ref   : (mid_p, F)   mxu dtype (pre-transposed, zero-padded rows)
    # b2_ref   : (1, F)       f32
    # out_ref  : (rt, F)      f32
    h = h_ref[...].astype(jnp.float32)
    hn = h * scale_ref[...] + shift_ref[...]
    hn = jnp.maximum(hn, 0.1 * hn)                   # LeakyReLU(0.1)
    y = jnp.dot(hn.astype(w2_ref.dtype), w2_ref[...],
                preferred_element_type=jnp.float32)
    out_ref[...] = (y + b2_ref[...]).astype(out_ref.dtype)


def output_layer_forward(x_nchw, params, num_classes, anchor_per_scale, *,
                         mxu_dtype=jnp.bfloat16, row_tile=1024):
    """Pallas implementation of OutputLayer.forward. Returns (B, A, H, W, C+5)."""
    B, Cin, H, W = x_nchw.shape
    mid = params["w1"].shape[0]
    C5 = num_classes + 5
    F = anchor_per_scale * C5
    N = B * H * W                          # BN statistics denominator (valid positions)
    eps = 1e-5
    LANE, SUB = 128, 8
    mid_p = _round_up(mid, LANE)
    W2p = _round_up(W + 2, SUB)            # sublane-aligned ("wide") padded width
    HW2p = H * W2p
    Nw = B * HW2p                          # wide row count carried through pass 2
    f32 = jnp.float32

    # ---- layout prep (cheap; weights are tiny & static) --------------------
    x_nhwc = jnp.transpose(x_nchw, (0, 2, 3, 1)).astype(f32)
    # H padded by (1, 2): the dy=2 taps read one extra row in the flattened view.
    xpad = jnp.pad(x_nhwc, ((0, 0), (1, 2), (1, W2p - W - 1), (0, 0))).astype(mxu_dtype)

    w1 = params["w1"].astype(f32)                                     # (mid, Cin, 3, 3)
    w1r = jnp.transpose(w1, (2, 3, 1, 0)).reshape(9 * Cin, mid)       # (dy,dx,c) x mid
    w1r = jnp.pad(w1r, ((0, 0), (0, mid_p - mid))).astype(mxu_dtype)

    gamma = jnp.pad(params["gamma"].astype(f32), (0, mid_p - mid), constant_values=1.0)
    beta = jnp.pad(params["beta"].astype(f32), (0, mid_p - mid))

    w2 = params["w2"].astype(f32).reshape(F, mid).T                   # (mid, F)
    w2_p = jnp.pad(w2, ((0, mid_p - mid), (0, 0))).astype(mxu_dtype)  # (mid_p, F)
    b2 = params["b2"].astype(f32).reshape(1, F)

    # ---- pass 1: 3x3 conv (single K=9*Cin matmul) + BN statistics ----------
    conv_kernel = functools.partial(_conv3x3_stats_kernel, H=H, W=W, W2p=W2p)
    vmem1 = _vmem_limit([((1, H + 3, W2p, Cin), mxu_dtype),
                         ((9 * Cin, mid_p), mxu_dtype),
                         ((1, HW2p, mid_p), mxu_dtype),
                         ((1, 1, mid_p), f32), ((1, 1, mid_p), f32),
                         ((HW2p, 9 * Cin), f32),       # im2col LHS (spill headroom)
                         ((HW2p, mid_p), f32)])        # f32 acc   (spill headroom)
    h, s_b, q_b = pl.pallas_call(
        conv_kernel,
        out_shape=(
            jax.ShapeDtypeStruct((B, HW2p, mid_p), mxu_dtype),
            jax.ShapeDtypeStruct((B, 1, mid_p), f32),
            jax.ShapeDtypeStruct((B, 1, mid_p), f32),
        ),
        grid_spec=pltpu.PrefetchScalarGridSpec(
            num_scalar_prefetch=0,
            grid=(B,),
            in_specs=[
                pl.BlockSpec((1, H + 3, W2p, Cin), lambda b: (b, 0, 0, 0)),
                pl.BlockSpec((9 * Cin, mid_p), lambda b: (0, 0)),
            ],
            out_specs=(
                pl.BlockSpec((1, HW2p, mid_p), lambda b: (b, 0, 0)),
                pl.BlockSpec((1, 1, mid_p), lambda b: (b, 0, 0)),
                pl.BlockSpec((1, 1, mid_p), lambda b: (b, 0, 0)),
            ),
        ),
        compiler_params=pltpu.CompilerParams(
            dimension_semantics=("parallel",),      # per-image partials -> megacore ok
            vmem_limit_bytes=vmem1,
        ),
    )(xpad, w1r)

    # ---- finalize BN (train-mode batch stats, biased var, eps=1e-5) --------
    nf = jnp.asarray(N, f32)
    s = jnp.sum(s_b, axis=(0, 1))
    q = jnp.sum(q_b, axis=(0, 1))
    mean = s / nf
    var = jnp.maximum(q / nf - mean * mean, 0.0)
    inv = lax.rsqrt(var + eps)
    scale = (gamma * inv).reshape(1, mid_p)
    shift = (beta - mean * gamma * inv).reshape(1, mid_p)

    # ---- pass 2: normalize + LeakyReLU + 1x1 conv (row-tiled, pipelined) ---
    rt = min(row_tile, Nw)
    if rt < Nw:
        rt = max(SUB, (rt // SUB) * SUB)
    # Ragged last tile (Nw % rt != 0) relies on Pallas' masked stores; the over-read
    # rows of h2 only feed lanes that are discarded.
    h2 = h.reshape(Nw, mid_p)
    vmem2 = _vmem_limit([((rt, mid_p), mxu_dtype), ((1, mid_p), f32), ((1, mid_p), f32),
                         ((mid_p, F), mxu_dtype), ((1, F), f32), ((rt, F), f32)])
    y = pl.pallas_call(
        _bn_lrelu_conv1x1_kernel,
        out_shape=jax.ShapeDtypeStruct((Nw, F), f32),
        grid_spec=pltpu.PrefetchScalarGridSpec(
            num_scalar_prefetch=0,
            grid=(pl.cdiv(Nw, rt),),
            in_specs=[
                pl.BlockSpec((rt, mid_p), lambda i: (i, 0)),
                pl.BlockSpec((1, mid_p), lambda i: (0, 0)),
                pl.BlockSpec((1, mid_p), lambda i: (0, 0)),
                pl.BlockSpec((mid_p, F), lambda i: (0, 0)),
                pl.BlockSpec((1, F), lambda i: (0, 0)),
            ],
            out_specs=pl.BlockSpec((rt, F), lambda i: (i, 0)),
        ),
        compiler_params=pltpu.CompilerParams(
            dimension_semantics=("parallel",),      # independent row tiles (megacore)
            vmem_limit_bytes=vmem2,
        ),
    )(h2, scale, shift, w2_p, b2)

    # ---- drop wide columns, reshape like PyTorch ----------------------------
    # y[b*HW2p + y*W2p + u, a*(C+5)+c] -> (B, A, H, W, C+5), keeping only u < W.
    y = y.reshape(B, H, W2p, anchor_per_scale, C5)[:, :, :W]
    return jnp.transpose(y, (0, 3, 1, 2, 4))


def _reference_forward(x_nchw, params, num_classes, anchor_per_scale):
    """Plain-JAX f32 reference mirroring the PyTorch module."""
    B, Cin, H, W = x_nchw.shape
    mid = params["w1"].shape[0]
    F = anchor_per_scale * (num_classes + 5)
    x = x_nchw.astype(jnp.float32)
    h = lax.conv_general_dilated(
        x, params["w1"].astype(jnp.float32), window_strides=(1, 1), padding="SAME",
        dimension_numbers=("NCHW", "OIHW", "NCHW"), precision=lax.Precision.HIGHEST)
    mean = h.mean(axis=(0, 2, 3), keepdims=True)
    var = ((h - mean) ** 2).mean(axis=(0, 2, 3), keepdims=True)   # biased, train mode
    hn = (h - mean) * lax.rsqrt(var + 1e-5)
    hn = hn * params["gamma"].reshape(1, mid, 1, 1) + params["beta"].reshape(1, mid, 1, 1)
    hn = jnp.where(hn > 0, hn, 0.1 * hn)
    w2 = params["w2"].astype(jnp.float32).reshape(F, mid)
    y = jnp.einsum("bchw,fc->bfhw", hn, w2, precision=lax.Precision.HIGHEST)
    y = y + params["b2"].reshape(1, F, 1, 1)
    y = y.reshape(B, anchor_per_scale, num_classes + 5, H, W)
    return jnp.transpose(y, (0, 1, 3, 4, 2))


if __name__ == "__main__":
    # Small shapes consistent with the module.
    B, Cin, H, W = 2, 4, 16, 16
    mid_channels = 32
    num_classes = 3
    anchor_per_scale = 3
    F = anchor_per_scale * (num_classes + 5)      # 24
    anchors = [(10, 13), (16, 30), (33, 23)]      # carried by DetectionLayer (identity)

    key = jax.random.PRNGKey(0)
    kx, k1, k2, k3, kg, kb = jax.random.split(key, 6)

    x = jax.random.normal(kx, (B, Cin, H, W), dtype=jnp.float32)

    params = {
        # Conv2d(in=Cin, out=mid, 3x3, bias=False)
        "w1": 0.1 * jax.random.normal(k1, (mid_channels, Cin, 3, 3), dtype=jnp.float32),
        # BatchNorm2d(mid) affine params (perturbed from defaults for a nontrivial test)
        "gamma": 1.0 + 0.05 * jax.random.normal(kg, (mid_channels,), dtype=jnp.float32),
        "beta": 0.05 * jax.random.normal(kb, (mid_channels,), dtype=jnp.float32),
        # Conv2d(mid, F, 1x1, bias=True)
        "w2": 0.1 * jax.random.normal(k2, (F, mid_channels, 1, 1), dtype=jnp.float32),
        "b2": 0.05 * jax.random.normal(k3, (F,), dtype=jnp.float32),
    }

    ref = _reference_forward(x, params, num_classes, anchor_per_scale)

    # f32 MXU-operand path (exercises the multi-tile pass-2 grid) -> tight check.
    out_f32 = output_layer_forward(x, params, num_classes, anchor_per_scale,
                                   mxu_dtype=jnp.float32, row_tile=256)
    out_f32 = jax.block_until_ready(out_f32)
    assert out_f32.shape == (B, anchor_per_scale, H, W, num_classes + 5), out_f32.shape
    assert jnp.allclose(out_f32, ref, atol=5e-3, rtol=5e-3), \
        float(jnp.max(jnp.abs(out_f32 - ref)))

    # bf16 MXU-operand path (default / performance config) -> loose check.
    out_bf16 = output_layer_forward(x, params, num_classes, anchor_per_scale)
    out_bf16 = jax.block_until_ready(out_bf16)
    assert out_bf16.shape == (B, anchor_per_scale, H, W, num_classes + 5), out_bf16.shape
    assert jnp.allclose(out_bf16, ref, atol=5e-2, rtol=5e-2), \
        float(jnp.max(jnp.abs(out_bf16 - ref)))

    print("KERNEL_OK")
</pallas_src>

<mosaic_0001>
module attributes {stable_mosaic.version = 11 : i64} {
  func.func @_conv3x3_stats_kernel(%arg0: i32, %arg1: memref<1x19x24x4xf32, #tpu.memory_space<vmem>>, %arg2: memref<36x128xf32, #tpu.memory_space<vmem>>, %arg3: memref<1x384x128xf32, #tpu.memory_space<vmem>>, %arg4: memref<1x1x128xf32, #tpu.memory_space<vmem>>, %arg5: memref<1x1x128xf32, #tpu.memory_space<vmem>>) attributes {dimension_semantics = [#tpu.dimension_semantics<parallel>], iteration_bounds = array<i64: 2>, scalar_prefetch = 0 : i64, scratch_operands = 0 : i64, tpu.core_type = #tpu.core_type<tc>, window_params = [{transform_indices = @transform_0, window_bounds = array<i64: 1, 19, 24, 4>}, {pipeline_mode = #tpu.pipeline_mode<synchronous>, transform_indices = @transform_1, window_bounds = array<i64: 36, 128>}, {transform_indices = @transform_2, window_bounds = array<i64: 1, 384, 128>}, {transform_indices = @transform_3, window_bounds = array<i64: 1, 1, 128>}, {transform_indices = @transform_4, window_bounds = array<i64: 1, 1, 128>}]} {
    %c0 = arith.constant 0 : index
    %c0_0 = arith.constant 0 : index
    %c0_1 = arith.constant 0 : index
    %c0_2 = arith.constant 0 : index
    %0 = vector.load %arg1[%c0, %c0_0, %c0_1, %c0_2] : memref<1x19x24x4xf32, #tpu.memory_space<vmem>>, vector<1x17x24x4xf32>
    %1 = vector.shape_cast %0 : vector<1x17x24x4xf32> to vector<17x24x4xf32>
    %2 = vector.shape_cast %1 : vector<17x24x4xf32> to vector<408x4xf32>
    %3 = vector.extract_strided_slice %2 {offsets = [0, 0], sizes = [384, 4], strides = [1, 1]} : vector<408x4xf32> to vector<384x4xf32>
    %c0_3 = arith.constant 0 : index
    %c0_4 = arith.constant 0 : index
    %c0_5 = arith.constant 0 : index
    %c0_6 = arith.constant 0 : index
    %4 = vector.load %arg1[%c0_3, %c0_4, %c0_5, %c0_6] : memref<1x19x24x4xf32, #tpu.memory_space<vmem>>, vector<1x17x24x4xf32>
    %5 = vector.shape_cast %4 : vector<1x17x24x4xf32> to vector<17x24x4xf32>
    %6 = vector.shape_cast %5 : vector<17x24x4xf32> to vector<408x4xf32>
    %7 = vector.extract_strided_slice %6 {offsets = [1, 0], sizes = [384, 4], strides = [1, 1]} : vector<408x4xf32> to vector<384x4xf32>
    %c0_7 = arith.constant 0 : index
    %c0_8 = arith.constant 0 : index
    %c0_9 = arith.constant 0 : index
    %c0_10 = arith.constant 0 : index
    %8 = vector.load %arg1[%c0_7, %c0_8, %c0_9, %c0_10] : memref<1x19x24x4xf32, #tpu.memory_space<vmem>>, vector<1x17x24x4xf32>
    %9 = vector.shape_cast %8 : vector<1x17x24x4xf32> to vector<17x24x4xf32>
    %10 = vector.shape_cast %9 : vector<17x24x4xf32> to vector<408x4xf32>
    %11 = vector.extract_strided_slice %10 {offsets = [2, 0], sizes = [384, 4], strides = [1, 1]} : vector<408x4xf32> to vector<384x4xf32>
    %c0_11 = arith.constant 0 : index
    %c1 = arith.constant 1 : index
    %c0_12 = arith.constant 0 : index
    %c0_13 = arith.constant 0 : index
    %12 = vector.load %arg1[%c0_11, %c1, %c0_12, %c0_13] : memref<1x19x24x4xf32, #tpu.memory_space<vmem>>, vector<1x17x24x4xf32>
    %13 = vector.shape_cast %12 : vector<1x17x24x4xf32> to vector<17x24x4xf32>
    %14 = vector.shape_cast %13 : vector<17x24x4xf32> to vector<408x4xf32>
    %15 = vector.extract_strided_slice %14 {offsets = [0, 0], sizes = [384, 4], strides = [1, 1]} : vector<408x4xf32> to vector<384x4xf32>
    %c0_14 = arith.constant 0 : index
    %c1_15 = arith.constant 1 : index
    %c0_16 = arith.constant 0 : index
    %c0_17 = arith.constant 0 : index
    %16 = vector.load %arg1[%c0_14, %c1_15, %c0_16, %c0_17] : memref<1x19x24x4xf32, #tpu.memory_space<vmem>>, vector<1x17x24x4xf32>
    %17 = vector.shape_cast %16 : vector<1x17x24x4xf32> to vector<17x24x4xf32>
    %18 = vector.shape_cast %17 : vector<17x24x4xf32> to vector<408x4xf32>
    %19 = vector.extract_strided_slice %18 {offsets = [1, 0], sizes = [384, 4], strides = [1, 1]} : vector<408x4xf32> to vector<384x4xf32>
    %c0_18 = arith.constant 0 : index
    %c1_19 = arith.constant 1 : index
    %c0_20 = arith.constant 0 : index
    %c0_21 = arith.constant 0 : index
    %20 = vector.load %arg1[%c0_18, %c1_19, %c0_20, %c0_21] : memref<1x19x24x4xf32, #tpu.memory_space<vmem>>, vector<1x17x24x4xf32>
    %21 = vector.shape_cast %20 : vector<1x17x24x4xf32> to vector<17x24x4xf32>
    %22 = vector.shape_cast %21 : vector<17x24x4xf32> to vector<408x4xf32>
    %23 = vector.extract_strided_slice %22 {offsets = [2, 0], sizes = [384, 4], strides = [1, 1]} : vector<408x4xf32> to vector<384x4xf32>
    %c0_22 = arith.constant 0 : index
    %c2 = arith.constant 2 : index
    %c0_23 = arith.constant 0 : index
    %c0_24 = arith.constant 0 : index
    %24 = vector.load %arg1[%c0_22, %c2, %c0_23, %c0_24] : memref<1x19x24x4xf32, #tpu.memory_space<vmem>>, vector<1x17x24x4xf32>
    %25 = vector.shape_cast %24 : vector<1x17x24x4xf32> to vector<17x24x4xf32>
    %26 = vector.shape_cast %25 : vector<17x24x4xf32> to vector<408x4xf32>
    %27 = vector.extract_strided_slice %26 {offsets = [0, 0], sizes = [384, 4], strides = [1, 1]} : vector<408x4xf32> to vector<384x4xf32>
    %c0_25 = arith.constant 0 : index
    %c2_26 = arith.constant 2 : index
    %c0_27 = arith.constant 0 : index
    %c0_28 = arith.constant 0 : index
    %28 = vector.load %arg1[%c0_25, %c2_26, %c0_27, %c0_28] : memref<1x19x24x4xf32, #tpu.memory_space<vmem>>, vector<1x17x24x4xf32>
    %29 = vector.shape_cast %28 : vector<1x17x24x4xf32> to vector<17x24x4xf32>
    %30 = vector.shape_cast %29 : vector<17x24x4xf32> to vector<408x4xf32>
    %31 = vector.extract_strided_slice %30 {offsets = [1, 0], sizes = [384, 4], strides = [1, 1]} : vector<408x4xf32> to vector<384x4xf32>
    %c0_29 = arith.constant 0 : index
    %c2_30 = arith.constant 2 : index
    %c0_31 = arith.constant 0 : index
    %c0_32 = arith.constant 0 : index
    %32 = vector.load %arg1[%c0_29, %c2_30, %c0_31, %c0_32] : memref<1x19x24x4xf32, #tpu.memory_space<vmem>>, vector<1x17x24x4xf32>
    %33 = vector.shape_cast %32 : vector<1x17x24x4xf32> to vector<17x24x4xf32>
    %34 = vector.shape_cast %33 : vector<17x24x4xf32> to vector<408x4xf32>
    %35 = vector.extract_strided_slice %34 {offsets = [2, 0], sizes = [384, 4], strides = [1, 1]} : vector<408x4xf32> to vector<384x4xf32>
    %36 = tpu.concatenate %3, %7, %11, %15, %19, %23, %27, %31, %35 in 1 : vector<384x4xf32>, vector<384x4xf32>, vector<384x4xf32>, vector<384x4xf32>, vector<384x4xf32>, vector<384x4xf32>, vector<384x4xf32>, vector<384x4xf32>, vector<384x4xf32> -> vector<384x36xf32>
    %c0_33 = arith.constant 0 : index
    %c0_34 = arith.constant 0 : index
    %37 = vector.load %arg2[%c0_33, %c0_34] : memref<36x128xf32, #tpu.memory_space<vmem>>, vector<36x128xf32>
    %cst = arith.constant dense<0.000000e+00> : vector<384x128xf32>
    %38 = tpu.matmul %36, %37, %cst {dimension_numbers = #tpu.dot_dimension_numbers<[1], [0], [0], [1], [0, 0, 1, 1], [], []>} : vector<384x36xf32>, vector<36x128xf32>, vector<384x128xf32> -> vector<384x128xf32>
    %c0_35 = arith.constant 0 : index
    %c0_36 = arith.constant 0 : index
    %c0_37 = arith.constant 0 : index
    %39 = vector.load %arg3[%c0_35, %c0_36, %c0_37] : memref<1x384x128xf32, #tpu.memory_space<vmem>>, vector<1x384x128xf32>
    %40 = vector.shape_cast %39 : vector<1x384x128xf32> to vector<384x128xf32>
    %41 = vector.shape_cast %38 : vector<384x128xf32> to vector<1x384x128xf32>
    tpu.vector_store %arg3[%c0_35, %c0_36, %c0_37], %41 {strides = array<i32>} : memref<1x384x128xf32, #tpu.memory_space<vmem>>, vector<1x384x128xf32>,
    %42 = tpu.iota {dimensions = array<i32: 1>} : vector<16x24x1xi32>
    %43 = vector.shape_cast %42 : vector<16x24x1xi32> to vector<384x1xi32>
    %c16_i32 = arith.constant 16 : i32
    %44 = vector.broadcast %c16_i32 : i32 to vector<384x1xi32>
    %45 = arith.cmpi slt, %43, %44 : vector<384x1xi32>
    %46 = arith.extui %45 : vector<384x1xi1> to vector<384x1xi32>
    %47 = arith.sitofp %46 : vector<384x1xi32> to vector<384x1xf32>
    %48 = vector.broadcast %47 : vector<384x1xf32> to vector<384x128xf32>
    %49 = arith.mulf %38, %48 : vector<384x128xf32>
    %cst_38 = arith.constant dense<0.000000e+00> : vector<128xf32>
    %50 = vector.multi_reduction <add>, %49, %cst_38 [0] : vector<384x128xf32> to vector<128xf32>
    %51 = vector.shape_cast %50 : vector<128xf32> to vector<1x128xf32>
    %c0_39 = arith.constant 0 : index
    %c0_40 = arith.constant 0 : index
    %c0_41 = arith.constant 0 : index
    %52 = vector.load %arg4[%c0_39, %c0_40, %c0_41] : memref<1x1x128xf32, #tpu.memory_space<vmem>>, vector<1x1x128xf32>
    %53 = vector.shape_cast %52 : vector<1x1x128xf32> to vector<1x128xf32>
    %54 = vector.shape_cast %51 : vector<1x128xf32> to vector<1x1x128xf32>
    tpu.vector_store %arg4[%c0_39, %c0_40, %c0_41], %54 {strides = array<i32>} : memref<1x1x128xf32, #tpu.memory_space<vmem>>, vector<1x1x128xf32>,
    %55 = arith.mulf %49, %38 : vector<384x128xf32>
    %cst_42 = arith.constant dense<0.000000e+00> : vector<128xf32>
    %56 = vector.multi_reduction <add>, %55, %cst_42 [0] : vector<384x128xf32> to vector<128xf32>
    %57 = vector.shape_cast %56 : vector<128xf32> to vector<1x128xf32>
    %c0_43 = arith.constant 0 : index
    %c0_44 = arith.constant 0 : index
    %c0_45 = arith.constant 0 : index
    %58 = vector.load %arg5[%c0_43, %c0_44, %c0_45] : memref<1x1x128xf32, #tpu.memory_space<vmem>>, vector<1x1x128xf32>
    %59 = vector.shape_cast %58 : vector<1x1x128xf32> to vector<1x128xf32>
    %60 = vector.shape_cast %57 : vector<1x128xf32> to vector<1x1x128xf32>
    tpu.vector_store %arg5[%c0_43, %c0_44, %c0_45], %60 {strides = array<i32>} : memref<1x1x128xf32, #tpu.memory_space<vmem>>, vector<1x1x128xf32>,
    return
  }
  func.func @transform_0(%arg0: i32) -> (i32, i32, i32, i32) {
    %c0_i32 = arith.constant 0 : i32
    %c0_i32_0 = arith.constant 0 : i32
    %c0_i32_1 = arith.constant 0 : i32
    %c0_i32_2 = arith.constant 0 : i32
    return %arg0, %c0_i32, %c0_i32_0, %c0_i32_1 : i32, i32, i32, i32
  }
  func.func @transform_1(%arg0: i32) -> (i32, i32) {
    %c0_i32 = arith.constant 0 : i32
    %c0_i32_0 = arith.constant 0 : i32
    %c0_i32_1 = arith.constant 0 : i32
    return %c0_i32, %c0_i32_0 : i32, i32
  }
  func.func @transform_2(%arg0: i32) -> (i32, i32, i32) {
    %c0_i32 = arith.constant 0 : i32
    %c0_i32_0 = arith.constant 0 : i32
    %c0_i32_1 = arith.constant 0 : i32
    return %arg0, %c0_i32, %c0_i32_0 : i32, i32, i32
  }
  func.func @transform_3(%arg0: i32) -> (i32, i32, i32) {
    %c0_i32 = arith.constant 0 : i32
    %c0_i32_0 = arith.constant 0 : i32
    %c0_i32_1 = arith.constant 0 : i32
    return %arg0, %c0_i32, %c0_i32_0 : i32, i32, i32
  }
  func.func @transform_4(%arg0: i32) -> (i32, i32, i32) {
    %c0_i32 = arith.constant 0 : i32
    %c0_i32_0 = arith.constant 0 : i32
    %c0_i32_1 = arith.constant 0 : i32
    return %arg0, %c0_i32, %c0_i32_0 : i32, i32, i32
  }
}

</mosaic_0001>

<llo_original>
// kernel: tpu_custom_call.1
$region0: #{tpu_custom_call.1}
  #allocation0 [shape = 'u32[]', space=smem, size = 0x4, offset = 0x4, fixed_abs, tag = 'smem constant byte address 0x4 - core index']
  #allocation1 [shape = 'u32[72,128]{1,0:T(1,128)}', space=vmem, size = 0x9000, scoped, tag = 'internal scratch']
  %s0 = inlined_call_operand.vmem [shape: f32[2,19,24,4], index: 0, kind: input, shape index: {}]
  %s1 = inlined_call_operand.vmem [shape: f32[36,128], index: 1, kind: input, shape index: {}]
  %s2 = inlined_call_operand.hbm [shape: f32[2,384,128], index: 2, kind: output, shape index: {0}]
  %s3 = inlined_call_operand.hbm [shape: f32[2,1,128], index: 3, kind: output, shape index: {1}]
  %s4 = inlined_call_operand.hbm [shape: f32[2,1,128], index: 4, kind: output, shape index: {2}]
  %5 = xla_tuple %s2, %s3, %s4
  %s6 = sld [smem:[#allocation0]]
  $region57: #{tpu_custom_call.1} parent=0
    _
  %s8 = ssub.s32 1, %s6
  %s9 = scalar_select 0, %s8, %s6
  $region1: #{tpu_custom_call.1} parent=0
    #allocation2 [shape = 'u8[393216]{0}', space=vmem, size = 0x60000, scoped, tag = 'output window, operand 0']
    #allocation3 [shape = 's32[2]{0}', space=sflag, size = 0x8, scoped, tag = 'scoped memory for tpu_custom_call.1']
    #allocation4 [shape = 'u8[1024]{0}', space=vmem, size = 0x400, scoped, tag = 'output window, operand 1']
    #allocation5 [shape = 's32[2]{0}', space=sflag, size = 0x8, scoped, tag = 'scoped memory for tpu_custom_call.1']
    #allocation6 [shape = 'u8[1024]{0}', space=vmem, size = 0x400, scoped, tag = 'output window, operand 2']
    %10 = vsyncpa [#allocation3], 0
    %s11 = scalar_lea.sflag [#allocation3], 1
    %12 = vsyncpa %s11, 0
    %13 = vsyncpa [#allocation5], 0
    %s14 = scalar_lea.sflag [#allocation5], 1
    %15 = vsyncpa %s14, 0
    loop: start=0, step=1, limit=4
    $region2: #{tpu_custom_call.1} parent=1 // loop_pre_header
      _
    $region3: #{tpu_custom_call.1} parent=1 // loop_header
      %s17 = sphi 0, %s21
      %p18 = scmp.ge.s32.totalorder %s17, 4
      %s27 = sphi 0, %s29
      %s30 = sphi 0, %s27
      %s31 = sphi 0, %s30
      %s47 = sphi 0, %s31
      %s51 = sphi 0, %s51
      %s53 = sphi 0, %s51
      %s54 = sphi 0, %s53
      %s68 = sphi 0, %s54
      %s74 = sphi 0, %s76
      %s77 = sphi 0, %s74
      %s78 = sphi 0, %s77
      %s94 = sphi 0, %s78
      %s100 = sphi 0, %s102
      %s103 = sphi 0, %s100
      %s104 = sphi 0, %s103
      %s120 = sphi 0, %s104
      %s126 = sphi 0, %s128
      %s129 = sphi 0, %s126
      %s130 = sphi 0, %s129
      %s146 = sphi 0, %s130
    $region4: #{tpu_custom_call.1} parent=1 // loop_header_branch
      %20 = sbr.rel (%p18) target = $region8
    $region5: #{tpu_custom_call.1} parent=1 // loop_body
      %s22 = ssub.s32 %s17, 1
      %s23 = ssub.s32 %s17, 2
      %s24 = sadd.s32 %s17, 1
      %s25 = ssub.s32 %s17, %s24
      %p26 = scmp.eq.s32.totalorder %s25, 0
      %s28 = sadd.s32 %s27, 1
      %s29 = scalar_select %p26, %s27, %s28
      %p32 = pneg %p26
      %p33 = scmp.eq.s32.totalorder %s17, 1
      %p34 = por %p32, %p33
      %p35 = scmp.ne.s32.totalorder %s27, %s30
      %p36 = scmp.eq.s32.totalorder %s17, 0
      %p37 = por %p35, %p36
      %p38 = scmp.ne.s32.totalorder %s27, %s30
      %p39 = scmp.eq.s32.totalorder %s22, 1
      %p40 = por %p38, %p39
      %p41 = scmp.ne.s32.totalorder %s30, %s31
      %p42 = scmp.eq.s32.totalorder %s22, 0
      %p43 = por %p41, %p42
      %p44 = scmp.ne.s32.totalorder %s30, %s31
      %p45 = scmp.eq.s32.totalorder %s23, 1
      %p46 = por %p44, %p45
      %p48 = scmp.ne.s32.totalorder %s31, %s47
      %p49 = scmp.eq.s32.totalorder %s23, 0
      %p50 = por %p48, %p49
      %s52 = sadd.s32 %s51, 1
      %p55 = scmp.eq.s32.totalorder %s17, 1
      %p56 = scmp.ne.s32.totalorder %s51, %s53
      %p57 = scmp.eq.s32.totalorder %s17, 0
      %p58 = por %p56, %p57
      %p59 = scmp.ne.s32.totalorder %s51, %s53
      %p60 = scmp.eq.s32.totalorder %s22, 1
      %p61 = por %p59, %p60
      %p62 = scmp.ne.s32.totalorder %s53, %s54
      %p63 = scmp.eq.s32.totalorder %s22, 0
      %p64 = por %p62, %p63
      %p65 = scmp.ne.s32.totalorder %s53, %s54
      %p66 = scmp.eq.s32.totalorder %s23, 1
      %p67 = por %p65, %p66
      %p69 = scmp.ne.s32.totalorder %s54, %s68
      %p70 = scmp.eq.s32.totalorder %s23, 0
      %p71 = por %p69, %p70
      %s72 = ssub.s32 %s17, %s24
      %p73 = scmp.eq.s32.totalorder %s72, 0
      %s75 = sadd.s32 %s74, 1
      %s76 = scalar_select %p73, %s74, %s75
      %p79 = pneg %p73
      %p80 = scmp.eq.s32.totalorder %s17, 1
      %p81 = por %p79, %p80
      %p82 = scmp.ne.s32.totalorder %s74, %s77
      %p83 = scmp.eq.s32.totalorder %s17, 0
      %p84 = por %p82, %p83
      %p85 = scmp.ne.s32.totalorder %s74, %s77
      %p86 = scmp.eq.s32.totalorder %s22, 1
      %p87 = por %p85, %p86
      %p88 = scmp.ne.s32.totalorder %s77, %s78
      %p89 = scmp.eq.s32.totalorder %s22, 0
      %p90 = por %p88, %p89
      %p91 = scmp.ne.s32.totalorder %s77, %s78
      %p92 = scmp.eq.s32.totalorder %s23, 1
      %p93 = por %p91, %p92
      %p95 = scmp.ne.s32.totalorder %s78, %s94
      %p96 = scmp.eq.s32.totalorder %s23, 0
      %p97 = por %p95, %p96
      %s98 = ssub.s32 %s17, %s24
      %p99 = scmp.eq.s32.totalorder %s98, 0
      %s101 = sadd.s32 %s100, 1
      %s102 = scalar_select %p99, %s100, %s101
      %p105 = pneg %p99
      %p106 = scmp.eq.s32.totalorder %s17, 1
      %p107 = por %p105, %p106
      %p108 = scmp.ne.s32.totalorder %s100, %s103
      %p109 = scmp.eq.s32.totalorder %s17, 0
      %p110 = por %p108, %p109
      %p111 = scmp.ne.s32.totalorder %s100, %s103
      %p112 = scmp.eq.s32.totalorder %s22, 1
      %p113 = por %p111, %p112
      %p114 = scmp.ne.s32.totalorder %s103, %s104
      %p115 = scmp.eq.s32.totalorder %s22, 0
      %p116 = por %p114, %p115
      %p117 = scmp.ne.s32.totalorder %s103, %s104
      %p118 = scmp.eq.s32.totalorder %s23, 1
      %p119 = por %p117, %p118
      %p121 = scmp.ne.s32.totalorder %s104, %s120
      %p122 = scmp.eq.s32.totalorder %s23, 0
      %p123 = por %p121, %p122
      %s124 = ssub.s32 %s17, %s24
      %p125 = scmp.eq.s32.totalorder %s124, 0
      %s127 = sadd.s32 %s126, 1
      %s128 = scalar_select %p125, %s126, %s127
      %p131 = pneg %p125
      %p132 = scmp.eq.s32.totalorder %s17, 1
      %p133 = por %p131, %p132
      %p134 = scmp.ne.s32.totalorder %s126, %s129
      %p135 = scmp.eq.s32.totalorder %s17, 0
      %p136 = por %p134, %p135
      %p137 = scmp.ne.s32.totalorder %s126, %s129
      %p138 = scmp.eq.s32.totalorder %s22, 1
      %p139 = por %p137, %p138
      %p140 = scmp.ne.s32.totalorder %s129, %s130
      %p141 = scmp.eq.s32.totalorder %s22, 0
      %p142 = por %p140, %p141
      %p143 = scmp.ne.s32.totalorder %s129, %s130
      %p144 = scmp.eq.s32.totalorder %s23, 1
      %p145 = por %p143, %p144
      %p147 = scmp.ne.s32.totalorder %s130, %s146
      %p148 = scmp.eq.s32.totalorder %s23, 0
      %p149 = por %p147, %p148
      %p150 = scmp.le.s32.totalorder 1, %s17
      %p151 = scmp.lt.s32.totalorder %s17, 3
      %p152 = pnand %p150, %p151
      %p153 = pneg %p152
      // Predicated region
      $region9: #{tpu_custom_call.1} parent=5 // pred_check
        _
      $region10: #{tpu_custom_call.1} parent=5 // pred_check_branch
        %155 = sbr.rel (%p152) target = $region12
      $region11: #{tpu_custom_call.1} parent=5 // pred_region
        %s156 = ssub.s32 %s17, 1
        // Predicated region
        $region13: #{tpu_custom_call.1} parent=11 // pred_check
          %p157 = pneg %p64
        $region14: #{tpu_custom_call.1} parent=11 // pred_check_branch
          %159 = sbr.rel (%p157) target = $region16
        $region15: #{tpu_custom_call.1} parent=11 // pred_region
          _
        $region16: #{tpu_custom_call.1} parent=11 // pred_fallthru
          _
      $region12: #{tpu_custom_call.1} parent=5 // pred_fallthru
        _
      %p160 = scmp.lt.s32.totalorder %s17, 2
      // Predicated region
      $region17: #{tpu_custom_call.1} parent=5 // pred_check
        %p161 = pneg %p160
      $region18: #{tpu_custom_call.1} parent=5 // pred_check_branch
        %163 = sbr.rel (%p161) target = $region20
      $region19: #{tpu_custom_call.1} parent=5 // pred_region
        // Predicated region
        $region21: #{tpu_custom_call.1} parent=19 // pred_check
          %p164 = pneg %p37
        $region22: #{tpu_custom_call.1} parent=19 // pred_check_branch
          %166 = sbr.rel (%p164) target = $region24
        $region23: #{tpu_custom_call.1} parent=19 // pred_region
          %p167 = scmp.lt.s32.totalorder %s17, 1
          %s168 = scalar_select %p167, %s17, 1
          %s169 = smul.addr %s168, 57
          %s170 = smul.addr %s169, 8
          %s171 = scalar_lea.vmem %s0, %s170
        $region24: #{tpu_custom_call.1} parent=19 // pred_fallthru
          _
      $region20: #{tpu_custom_call.1} parent=5 // pred_fallthru
        _
      %p172 = scmp.le.s32.totalorder 1, %s17
      %p173 = scmp.lt.s32.totalorder %s17, 3
      %p174 = pnand %p172, %p173
      %p175 = pneg %p174
      // Predicated region
      $region25: #{tpu_custom_call.1} parent=5 // pred_check
        _
      $region26: #{tpu_custom_call.1} parent=5 // pred_check_branch
        %177 = sbr.rel (%p174) target = $region28
      $region27: #{tpu_custom_call.1} parent=5 // pred_region
        %s178 = ssub.s32 %s17, 1
        %p179 = scmp.lt.s32.totalorder %s22, 1
        %s180 = scalar_select %p179, %s22, 1
        %s181 = smul.addr %s180, 57
        %s182 = smul.addr %s181, 8
        %s183 = scalar_lea.vmem %s0, %s182
        %p184 = pneg %p43
        %p185 = pneg %p40
        %p186 = pneg %p64
        %p187 = pneg %p61
        %p188 = pneg %p90
        %p189 = pneg %p87
        %s190 = sand.u32 %s77, 1
        %s191 = scalar_lea.sflag [#allocation3], %s190
        %s192 = sand.u32 %s77, 1
        %s193 = smul.addr %s192, 384
        %s194 = scalar_lea.vmem [#allocation2], %s193
        %p195 = pneg %p116
        %p196 = pneg %p113
        %s197 = sand.u32 %s22, 1
        %s198 = scalar_lea.sflag [#allocation5], %s197
        %s199 = sand.u32 %s103, 1
        %s200 = scalar_lea.vmem [#allocation4], %s199
        %p201 = pneg %p142
        %p202 = pneg %p139
        %s203 = sand.u32 %s22, 1
        %s204 = scalar_lea.sflag [#allocation5], %s203
        %s205 = sand.u32 %s129, 1
        %s206 = scalar_lea.vmem [#allocation6], %s205
        %p207 = scmp.lt.s32.totalorder %s22, 1
        %s208 = scalar_select %p207, %s22, 1
        %s209 = smul.addr %s208, 57
        %s210 = smul.addr %s209, 8
        %s211 = scalar_lea.vmem %s0, %s210
        %v212 = vld [vmem:[%s211] sm:$0xff]
        %v213 = vld [vmem:[%s211 + $0x8] sm:$0xff]
        %v214 = vld [vmem:[%s211 + $0x10] sm:$0xff]
        %v215 = vld [vmem:[%s211 + $0x18] sm:$0xff]
        %v216 = vld [vmem:[%s211 + $0x20] sm:$0xff]
        %v217 = vld [vmem:[%s211 + $0x28] sm:$0xff]
        %v218 = vld [vmem:[%s211 + $0x30] sm:$0xff]
        %v219 = vld [vmem:[%s211 + $0x38] sm:$0xff]
        %v220 = vld [vmem:[%s211 + $0x40] sm:$0xff]
        %v221 = vld [vmem:[%s211 + $0x48] sm:$0xff]
        %v222 = vld [vmem:[%s211 + $0x50] sm:$0xff]
        %v223 = vld [vmem:[%s211 + $0x58] sm:$0xff]
        %v224 = vld [vmem:[%s211 + $0x60] sm:$0xff]
        %v225 = vld [vmem:[%s211 + $0x68] sm:$0xff]
        %v226 = vld [vmem:[%s211 + $0x70] sm:$0xff]
        %v227 = vld [vmem:[%s211 + $0x78] sm:$0xff]
        %v228 = vld [vmem:[%s211 + $0x80] sm:$0xff]
        %v229 = vld [vmem:[%s211 + $0x88] sm:$0xff]
        %v230 = vld [vmem:[%s211 + $0x90] sm:$0xff]
        %v231 = vld [vmem:[%s211 + $0x98] sm:$0xff]
        %v232 = vld [vmem:[%s211 + $0xa0] sm:$0xff]
        %v233 = vld [vmem:[%s211 + $0xa8] sm:$0xff]
        %v234 = vld [vmem:[%s211 + $0xb0] sm:$0xff]
        %v235 = vld [vmem:[%s211 + $0xb8] sm:$0xff]
        %v236 = vld [vmem:[%s211 + $0xc0] sm:$0xff]
        %v237 = vld [vmem:[%s211 + $0xc8] sm:$0xff]
        %v238 = vld [vmem:[%s211 + $0xd0] sm:$0xff]
        %v239 = vld [vmem:[%s211 + $0xd8] sm:$0xff]
        %v240 = vld [vmem:[%s211 + $0xe0] sm:$0xff]
        %v241 = vld [vmem:[%s211 + $0xe8] sm:$0xff]
        %v242 = vld [vmem:[%s211 + $0xf0] sm:$0xff]
        %v243 = vld [vmem:[%s211 + $0xf8] sm:$0xff]
        %v244 = vld [vmem:[%s211 + $0x100] sm:$0xff]
        %v245 = vld [vmem:[%s211 + $0x108] sm:$0xff]
        %v246 = vld [vmem:[%s211 + $0x110] sm:$0xff]
        %v247 = vld [vmem:[%s211 + $0x118] sm:$0xff]
        %v248 = vld [vmem:[%s211 + $0x120] sm:$0xff]
        %v249 = vld [vmem:[%s211 + $0x128] sm:$0xff]
        %v250 = vld [vmem:[%s211 + $0x130] sm:$0xff]
        %v251 = vld [vmem:[%s211 + $0x138] sm:$0xff]
        %v252 = vld [vmem:[%s211 + $0x140] sm:$0xff]
        %v253 = vld [vmem:[%s211 + $0x148] sm:$0xff]
        %v254 = vld [vmem:[%s211 + $0x150] sm:$0xff]
        %v255 = vld [vmem:[%s211 + $0x158] sm:$0xff]
        %v256 = vld [vmem:[%s211 + $0x160] sm:$0xff]
        %v257 = vld [vmem:[%s211 + $0x168] sm:$0xff]
        %v258 = vld [vmem:[%s211 + $0x170] sm:$0xff]
        %v259 = vld [vmem:[%s211 + $0x178] sm:$0xff]
        %v260 = vld [vmem:[%s211 + $0x180] sm:$0xff]
        %s261 = scalar_lea.vmem %s211, 24
        %v262 = vld [vmem:[%s261] sm:$0xff]
        %v263 = vld [vmem:[%s261 + $0x8] sm:$0xff]
        %v264 = vld [vmem:[%s261 + $0x10] sm:$0xff]
        %v265 = vld [vmem:[%s261 + $0x18] sm:$0xff]
        %v266 = vld [vmem:[%s261 + $0x20] sm:$0xff]
        %v267 = vld [vmem:[%s261 + $0x28] sm:$0xff]
        %v268 = vld [vmem:[%s261 + $0x30] sm:$0xff]
        %v269 = vld [vmem:[%s261 + $0x38] sm:$0xff]
        %v270 = vld [vmem:[%s261 + $0x40] sm:$0xff]
        %v271 = vld [vmem:[%s261 + $0x48] sm:$0xff]
        %v272 = vld [vmem:[%s261 + $0x50] sm:$0xff]
        %v273 = vld [vmem:[%s261 + $0x58] sm:$0xff]
        %v274 = vld [vmem:[%s261 + $0x60] sm:$0xff]
        %v275 = vld [vmem:[%s261 + $0x68] sm:$0xff]
        %v276 = vld [vmem:[%s261 + $0x70] sm:$0xff]
        %v277 = vld [vmem:[%s261 + $0x78] sm:$0xff]
        %v278 = vld [vmem:[%s261 + $0x80] sm:$0xff]
        %v279 = vld [vmem:[%s261 + $0x88] sm:$0xff]
        %v280 = vld [vmem:[%s261 + $0x90] sm:$0xff]
        %v281 = vld [vmem:[%s261 + $0x98] sm:$0xff]
        %v282 = vld [vmem:[%s261 + $0xa0] sm:$0xff]
        %v283 = vld [vmem:[%s261 + $0xa8] sm:$0xff]
        %v284 = vld [vmem:[%s261 + $0xb0] sm:$0xff]
        %v285 = vld [vmem:[%s261 + $0xb8] sm:$0xff]
        %v286 = vld [vmem:[%s261 + $0xc0] sm:$0xff]
        %v287 = vld [vmem:[%s261 + $0xc8] sm:$0xff]
        %v288 = vld [vmem:[%s261 + $0xd0] sm:$0xff]
        %v289 = vld [vmem:[%s261 + $0xd8] sm:$0xff]
        %v290 = vld [vmem:[%s261 + $0xe0] sm:$0xff]
        %v291 = vld [vmem:[%s261 + $0xe8] sm:$0xff]
        %v292 = vld [vmem:[%s261 + $0xf0] sm:$0xff]
        %v293 = vld [vmem:[%s261 + $0xf8] sm:$0xff]
        %v294 = vld [vmem:[%s261 + $0x100] sm:$0xff]
        %v295 = vld [vmem:[%s261 + $0x108] sm:$0xff]
        %v296 = vld [vmem:[%s261 + $0x110] sm:$0xff]
        %v297 = vld [vmem:[%s261 + $0x118] sm:$0xff]
        %v298 = vld [vmem:[%s261 + $0x120] sm:$0xff]
        %v299 = vld [vmem:[%s261 + $0x128] sm:$0xff]
        %v300 = vld [vmem:[%s261 + $0x130] sm:$0xff]
        %v301 = vld [vmem:[%s261 + $0x138] sm:$0xff]
        %v302 = vld [vmem:[%s261 + $0x140] sm:$0xff]
        %v303 = vld [vmem:[%s261 + $0x148] sm:$0xff]
        %v304 = vld [vmem:[%s261 + $0x150] sm:$0xff]
        %v305 = vld [vmem:[%s261 + $0x158] sm:$0xff]
        %v306 = vld [vmem:[%s261 + $0x160] sm:$0xff]
        %v307 = vld [vmem:[%s261 + $0x168] sm:$0xff]
        %v308 = vld [vmem:[%s261 + $0x170] sm:$0xff]
        %v309 = vld [vmem:[%s261 + $0x178] sm:$0xff]
        %v310 = vld [vmem:[%s261 + $0x180] sm:$0xff]
        %s311 = scalar_lea.vmem %s211, 48
        %v312 = vld [vmem:[%s311] sm:$0xff]
        %v313 = vld [vmem:[%s311 + $0x8] sm:$0xff]
        %v314 = vld [vmem:[%s311 + $0x10] sm:$0xff]
        %v315 = vld [vmem:[%s311 + $0x18] sm:$0xff]
        %v316 = vld [vmem:[%s311 + $0x20] sm:$0xff]
        %v317 = vld [vmem:[%s311 + $0x28] sm:$0xff]
        %v318 = vld [vmem:[%s311 + $0x30] sm:$0xff]
        %v319 = vld [vmem:[%s311 + $0x38] sm:$0xff]
        %v320 = vld [vmem:[%s311 + $0x40] sm:$0xff]
        %v321 = vld [vmem:[%s311 + $0x48] sm:$0xff]
        %v322 = vld [vmem:[%s311 + $0x50] sm:$0xff]
        %v323 = vld [vmem:[%s311 + $0x58] sm:$0xff]
        %v324 = vld [vmem:[%s311 + $0x60] sm:$0xff]
        %v325 = vld [vmem:[%s311 + $0x68] sm:$0xff]
        %v326 = vld [vmem:[%s311 + $0x70] sm:$0xff]
        %v327 = vld [vmem:[%s311 + $0x78] sm:$0xff]
        %v328 = vld [vmem:[%s311 + $0x80] sm:$0xff]
        %v329 = vld [vmem:[%s311 + $0x88] sm:$0xff]
        %v330 = vld [vmem:[%s311 + $0x90] sm:$0xff]
        %v331 = vld [vmem:[%s311 + $0x98] sm:$0xff]
        %v332 = vld [vmem:[%s311 + $0xa0] sm:$0xff]
        %v333 = vld [vmem:[%s311 + $0xa8] sm:$0xff]
        %v334 = vld [vmem:[%s311 + $0xb0] sm:$0xff]
        %v335 = vld [vmem:[%s311 + $0xb8] sm:$0xff]
        %v336 = vld [vmem:[%s311 + $0xc0] sm:$0xff]
        %v337 = vld [vmem:[%s311 + $0xc8] sm:$0xff]
        %v338 = vld [vmem:[%s311 + $0xd0] sm:$0xff]
        %v339 = vld [vmem:[%s311 + $0xd8] sm:$0xff]
        %v340 = vld [vmem:[%s311 + $0xe0] sm:$0xff]
        %v341 = vld [vmem:[%s311 + $0xe8] sm:$0xff]
        %v342 = vld [vmem:[%s311 + $0xf0] sm:$0xff]
        %v343 = vld [vmem:[%s311 + $0xf8] sm:$0xff]
        %v344 = vld [vmem:[%s311 + $0x100] sm:$0xff]
        %v345 = vld [vmem:[%s311 + $0x108] sm:$0xff]
        %v346 = vld [vmem:[%s311 + $0x110] sm:$0xff]
        %v347 = vld [vmem:[%s311 + $0x118] sm:$0xff]
        %v348 = vld [vmem:[%s311 + $0x120] sm:$0xff]
        %v349 = vld [vmem:[%s311 + $0x128] sm:$0xff]
        %v350 = vld [vmem:[%s311 + $0x130] sm:$0xff]
        %v351 = vld [vmem:[%s311 + $0x138] sm:$0xff]
        %v352 = vld [vmem:[%s311 + $0x140] sm:$0xff]
        %v353 = vld [vmem:[%s311 + $0x148] sm:$0xff]
        %v354 = vld [vmem:[%s311 + $0x150] sm:$0xff]
        %v355 = vld [vmem:[%s311 + $0x158] sm:$0xff]
        %v356 = vld [vmem:[%s311 + $0x160] sm:$0xff]
        %v357 = vld [vmem:[%s311 + $0x168] sm:$0xff]
        %v358 = vld [vmem:[%s311 + $0x170] sm:$0xff]
        %v359 = vld [vmem:[%s311 + $0x178] sm:$0xff]
        %v360 = vld [vmem:[%s311 + $0x180] sm:$0xff]
        %vm410 = vcmask 1046528
        %v411 = vrot.slane %v212, 1
        %v412 = vrot.slane %v213, 1
        %v413 = vsel %vm410, %v411, %v412
        %v414 = vrot.slane %v214, 1
        %v415 = vsel %vm410, %v412, %v414
        %v416 = vrot.slane %v215, 1
        %v417 = vsel %vm410, %v414, %v416
        %v418 = vrot.slane %v216, 1
        %v419 = vsel %vm410, %v416, %v418
        %v420 = vrot.slane %v217, 1
        %v421 = vsel %vm410, %v418, %v420
        %v422 = vrot.slane %v218, 1
        %v423 = vsel %vm410, %v420, %v422
        %v424 = vrot.slane %v219, 1
        %v425 = vsel %vm410, %v422, %v424
        %v426 = vrot.slane %v220, 1
        %v427 = vsel %vm410, %v424, %v426
        %v428 = vrot.slane %v221, 1
        %v429 = vsel %vm410, %v426, %v428
        %v430 = vrot.slane %v222, 1
        %v431 = vsel %vm410, %v428, %v430
        %v432 = vrot.slane %v223, 1
        %v433 = vsel %vm410, %v430, %v432
        %v434 = vrot.slane %v224, 1
        %v435 = vsel %vm410, %v432, %v434
        %v436 = vrot.slane %v225, 1
        %v437 = vsel %vm410, %v434, %v436
        %v438 = vrot.slane %v226, 1
        %v439 = vsel %vm410, %v436, %v438
        %v440 = vrot.slane %v227, 1
        %v441 = vsel %vm410, %v438, %v440
        %v442 = vrot.slane %v228, 1
        %v443 = vsel %vm410, %v440, %v442
        %v444 = vrot.slane %v229, 1
        %v445 = vsel %vm410, %v442, %v444
        %v446 = vrot.slane %v230, 1
        %v447 = vsel %vm410, %v444, %v446
        %v448 = vrot.slane %v231, 1
        %v449 = vsel %vm410, %v446, %v448
        %v450 = vrot.slane %v232, 1
        %v451 = vsel %vm410, %v448, %v450
        %v452 = vrot.slane %v233, 1
        %v453 = vsel %vm410, %v450, %v452
        %v454 = vrot.slane %v234, 1
        %v455 = vsel %vm410, %v452, %v454
        %v456 = vrot.slane %v235, 1
        %v457 = vsel %vm410, %v454, %v456
        %v458 = vrot.slane %v236, 1
        %v459 = vsel %vm410, %v456, %v458
        %v460 = vrot.slane %v237, 1
        %v461 = vsel %vm410, %v458, %v460
        %v462 = vrot.slane %v238, 1
        %v463 = vsel %vm410, %v460, %v462
        %v464 = vrot.slane %v239, 1
        %v465 = vsel %vm410, %v462, %v464
        %v466 = vrot.slane %v240, 1
        %v467 = vsel %vm410, %v464, %v466
        %v468 = vrot.slane %v241, 1
        %v469 = vsel %vm410, %v466, %v468
        %v470 = vrot.slane %v242, 1
        %v471 = vsel %vm410, %v468, %v470
        %v472 = vrot.slane %v243, 1
        %v473 = vsel %vm410, %v470, %v472
        %v474 = vrot.slane %v244, 1
        %v475 = vsel %vm410, %v472, %v474
        %v476 = vrot.slane %v245, 1
        %v477 = vsel %vm410, %v474, %v476
        %v478 = vrot.slane %v246, 1
        %v479 = vsel %vm410, %v476, %v478
        %v480 = vrot.slane %v247, 1
        %v481 = vsel %vm410, %v478, %v480
        %v482 = vrot.slane %v248, 1
        %v483 = vsel %vm410, %v480, %v482
        %v484 = vrot.slane %v249, 1
        %v485 = vsel %vm410, %v482, %v484
        %v486 = vrot.slane %v250, 1
        %v487 = vsel %vm410, %v484, %v486
        %v488 = vrot.slane %v251, 1
        %v489 = vsel %vm410, %v486, %v488
        %v490 = vrot.slane %v252, 1
        %v491 = vsel %vm410, %v488, %v490
        %v492 = vrot.slane %v253, 1
        %v493 = vsel %vm410, %v490, %v492
        %v494 = vrot.slane %v254, 1
        %v495 = vsel %vm410, %v492, %v494
        %v496 = vrot.slane %v255, 1
        %v497 = vsel %vm410, %v494, %v496
        %v498 = vrot.slane %v256, 1
        %v499 = vsel %vm410, %v496, %v498
        %v500 = vrot.slane %v257, 1
        %v501 = vsel %vm410, %v498, %v500
        %v502 = vrot.slane %v258, 1
        %v503 = vsel %vm410, %v500, %v502
        %v504 = vrot.slane %v259, 1
        %v505 = vsel %vm410, %v502, %v504
        %v506 = vrot.slane %v260, 1
        %v507 = vsel %vm410, %v504, %v506
        %508 = vrot.lane.b32.xlu0 %v413, 4
        %v509 = vpop.permute.xlu0 %508
        %510 = vrot.lane.b32.xlu0 %v415, 4
        %v511 = vpop.permute.xlu0 %510
        %512 = vrot.lane.b32.xlu0 %v417, 4
        %v513 = vpop.permute.xlu0 %512
        %514 = vrot.lane.b32.xlu0 %v419, 4
        %v515 = vpop.permute.xlu0 %514
        %516 = vrot.lane.b32.xlu0 %v421, 4
        %v517 = vpop.permute.xlu0 %516
        %518 = vrot.lane.b32.xlu0 %v423, 4
        %v519 = vpop.permute.xlu0 %518
        %520 = vrot.lane.b32.xlu0 %v425, 4
        %v521 = vpop.permute.xlu0 %520
        %522 = vrot.lane.b32.xlu0 %v427, 4
        %v523 = vpop.permute.xlu0 %522
        %524 = vrot.lane.b32.xlu0 %v429, 4
        %v525 = vpop.permute.xlu0 %524
        %526 = vrot.lane.b32.xlu0 %v431, 4
        %v527 = vpop.permute.xlu0 %526
        %528 = vrot.lane.b32.xlu0 %v433, 4
        %v529 = vpop.permute.xlu0 %528
        %530 = vrot.lane.b32.xlu0 %v435, 4
        %v531 = vpop.permute.xlu0 %530
        %532 = vrot.lane.b32.xlu0 %v437, 4
        %v533 = vpop.permute.xlu0 %532
        %534 = vrot.lane.b32.xlu0 %v439, 4
        %v535 = vpop.permute.xlu0 %534
        %536 = vrot.lane.b32.xlu0 %v441, 4
        %v537 = vpop.permute.xlu0 %536
        %538 = vrot.lane.b32.xlu0 %v443, 4
        %v539 = vpop.permute.xlu0 %538
        %540 = vrot.lane.b32.xlu0 %v445, 4
        %v541 = vpop.permute.xlu0 %540
        %542 = vrot.lane.b32.xlu0 %v447, 4
        %v543 = vpop.permute.xlu0 %542
        %544 = vrot.lane.b32.xlu0 %v449, 4
        %v545 = vpop.permute.xlu0 %544
        %546 = vrot.lane.b32.xlu0 %v451, 4
        %v547 = vpop.permute.xlu0 %546
        %548 = vrot.lane.b32.xlu0 %v453, 4
        %v549 = vpop.permute.xlu0 %548
        %550 = vrot.lane.b32.xlu0 %v455, 4
        %v551 = vpop.permute.xlu0 %550
        %552 = vrot.lane.b32.xlu0 %v457, 4
        %v553 = vpop.permute.xlu0 %552
        %554 = vrot.lane.b32.xlu0 %v459, 4
        %v555 = vpop.permute.xlu0 %554
        %556 = vrot.lane.b32.xlu0 %v461, 4
        %v557 = vpop.permute.xlu0 %556
        %558 = vrot.lane.b32.xlu0 %v463, 4
        %v559 = vpop.permute.xlu0 %558
        %560 = vrot.lane.b32.xlu0 %v465, 4
        %v561 = vpop.permute.xlu0 %560
        %562 = vrot.lane.b32.xlu0 %v467, 4
        %v563 = vpop.permute.xlu0 %562
        %564 = vrot.lane.b32.xlu0 %v469, 4
        %v565 = vpop.permute.xlu0 %564
        %566 = vrot.lane.b32.xlu0 %v471, 4
        %v567 = vpop.permute.xlu0 %566
        %568 = vrot.lane.b32.xlu0 %v473, 4
        %v569 = vpop.permute.xlu0 %568
        %570 = vrot.lane.b32.xlu0 %v475, 4
        %v571 = vpop.permute.xlu0 %570
        %572 = vrot.lane.b32.xlu0 %v477, 4
        %v573 = vpop.permute.xlu0 %572
        %574 = vrot.lane.b32.xlu0 %v479, 4
        %v575 = vpop.permute.xlu0 %574
        %576 = vrot.lane.b32.xlu0 %v481, 4
        %v577 = vpop.permute.xlu0 %576
        %578 = vrot.lane.b32.xlu0 %v483, 4
        %v579 = vpop.permute.xlu0 %578
        %580 = vrot.lane.b32.xlu0 %v485, 4
        %v581 = vpop.permute.xlu0 %580
        %582 = vrot.lane.b32.xlu0 %v487, 4
        %v583 = vpop.permute.xlu0 %582
        %584 = vrot.lane.b32.xlu0 %v489, 4
        %v585 = vpop.permute.xlu0 %584
        %586 = vrot.lane.b32.xlu0 %v491, 4
        %v587 = vpop.permute.xlu0 %586
        %588 = vrot.lane.b32.xlu0 %v493, 4
        %v589 = vpop.permute.xlu0 %588
        %590 = vrot.lane.b32.xlu0 %v495, 4
        %v591 = vpop.permute.xlu0 %590
        %592 = vrot.lane.b32.xlu0 %v497, 4
        %v593 = vpop.permute.xlu0 %592
        %594 = vrot.lane.b32.xlu0 %v499, 4
        %v595 = vpop.permute.xlu0 %594
        %596 = vrot.lane.b32.xlu0 %v501, 4
        %v597 = vpop.permute.xlu0 %596
        %598 = vrot.lane.b32.xlu0 %v503, 4
        %v599 = vpop.permute.xlu0 %598
        %600 = vrot.lane.b32.xlu0 %v505, 4
        %v601 = vpop.permute.xlu0 %600
        %602 = vrot.lane.b32.xlu0 %v507, 4
        %v603 = vpop.permute.xlu0 %602
        %vm652 = vcmask 1045504
        %v653 = vrot.slane %v212, 2
        %v654 = vrot.slane %v213, 2
        %v655 = vsel %vm652, %v653, %v654
        %v656 = vrot.slane %v214, 2
        %v657 = vsel %vm652, %v654, %v656
        %v658 = vrot.slane %v215, 2
        %v659 = vsel %vm652, %v656, %v658
        %v660 = vrot.slane %v216, 2
        %v661 = vsel %vm652, %v658, %v660
        %v662 = vrot.slane %v217, 2
        %v663 = vsel %vm652, %v660, %v662
        %v664 = vrot.slane %v218, 2
        %v665 = vsel %vm652, %v662, %v664
        %v666 = vrot.slane %v219, 2
        %v667 = vsel %vm652, %v664, %v666
        %v668 = vrot.slane %v220, 2
        %v669 = vsel %vm652, %v666, %v668
        %v670 = vrot.slane %v221, 2
        %v671 = vsel %vm652, %v668, %v670
        %v672 = vrot.slane %v222, 2
        %v673 = vsel %vm652, %v670, %v672
        %v674 = vrot.slane %v223, 2
        %v675 = vsel %vm652, %v672, %v674
        %v676 = vrot.slane %v224, 2
        %v677 = vsel %vm652, %v674, %v676
        %v678 = vrot.slane %v225, 2
        %v679 = vsel %vm652, %v676, %v678
        %v680 = vrot.slane %v226, 2
        %v681 = vsel %vm652, %v678, %v680
        %v682 = vrot.slane %v227, 2
        %v683 = vsel %vm652, %v680, %v682
        %v684 = vrot.slane %v228, 2
        %v685 = vsel %vm652, %v682, %v684
        %v686 = vrot.slane %v229, 2
        %v687 = vsel %vm652, %v684, %v686
        %v688 = vrot.slane %v230, 2
        %v689 = vsel %vm652, %v686, %v688
        %v690 = vrot.slane %v231, 2
        %v691 = vsel %vm652, %v688, %v690
        %v692 = vrot.slane %v232, 2
        %v693 = vsel %vm652, %v690, %v692
        %v694 = vrot.slane %v233, 2
        %v695 = vsel %vm652, %v692, %v694
        %v696 = vrot.slane %v234, 2
        %v697 = vsel %vm652, %v694, %v696
        %v698 = vrot.slane %v235, 2
        %v699 = vsel %vm652, %v696, %v698
        %v700 = vrot.slane %v236, 2
        %v701 = vsel %vm652, %v698, %v700
        %v702 = vrot.slane %v237, 2
        %v703 = vsel %vm652, %v700, %v702
        %v704 = vrot.slane %v238, 2
        %v705 = vsel %vm652, %v702, %v704
        %v706 = vrot.slane %v239, 2
        %v707 = vsel %vm652, %v704, %v706
        %v708 = vrot.slane %v240, 2
        %v709 = vsel %vm652, %v706, %v708
        %v710 = vrot.slane %v241, 2
        %v711 = vsel %vm652, %v708, %v710
        %v712 = vrot.slane %v242, 2
        %v713 = vsel %vm652, %v710, %v712
        %v714 = vrot.slane %v243, 2
        %v715 = vsel %vm652, %v712, %v714
        %v716 = vrot.slane %v244, 2
        %v717 = vsel %vm652, %v714, %v716
        %v718 = vrot.slane %v245, 2
        %v719 = vsel %vm652, %v716, %v718
        %v720 = vrot.slane %v246, 2
        %v721 = vsel %vm652, %v718, %v720
        %v722 = vrot.slane %v247, 2
        %v723 = vsel %vm652, %v720, %v722
        %v724 = vrot.slane %v248, 2
        %v725 = vsel %vm652, %v722, %v724
        %v726 = vrot.slane %v249, 2
        %v727 = vsel %vm652, %v724, %v726
        %v728 = vrot.slane %v250, 2
        %v729 = vsel %vm652, %v726, %v728
        %v730 = vrot.slane %v251, 2
        %v731 = vsel %vm652, %v728, %v730
        %v732 = vrot.slane %v252, 2
        %v733 = vsel %vm652, %v730, %v732
        %v734 = vrot.slane %v253, 2
        %v735 = vsel %vm652, %v732, %v734
        %v736 = vrot.slane %v254, 2
        %v737 = vsel %vm652, %v734, %v736
        %v738 = vrot.slane %v255, 2
        %v739 = vsel %vm652, %v736, %v738
        %v740 = vrot.slane %v256, 2
        %v741 = vsel %vm652, %v738, %v740
        %v742 = vrot.slane %v257, 2
        %v743 = vsel %vm652, %v740, %v742
        %v744 = vrot.slane %v258, 2
        %v745 = vsel %vm652, %v742, %v744
        %v746 = vrot.slane %v259, 2
        %v747 = vsel %vm652, %v744, %v746
        %v748 = vrot.slane %v260, 2
        %v749 = vsel %vm652, %v746, %v748
        %750 = vrot.lane.b32.xlu0 %v655, 8
        %v751 = vpop.permute.xlu0 %750
        %752 = vrot.lane.b32.xlu0 %v657, 8
        %v753 = vpop.permute.xlu0 %752
        %754 = vrot.lane.b32.xlu0 %v659, 8
        %v755 = vpop.permute.xlu0 %754
        %756 = vrot.lane.b32.xlu0 %v661, 8
        %v757 = vpop.permute.xlu0 %756
        %758 = vrot.lane.b32.xlu0 %v663, 8
        %v759 = vpop.permute.xlu0 %758
        %760 = vrot.lane.b32.xlu0 %v665, 8
        %v761 = vpop.permute.xlu0 %760
        %762 = vrot.lane.b32.xlu0 %v667, 8
        %v763 = vpop.permute.xlu0 %762
        %764 = vrot.lane.b32.xlu0 %v669, 8
        %v765 = vpop.permute.xlu0 %764
        %766 = vrot.lane.b32.xlu0 %v671, 8
        %v767 = vpop.permute.xlu0 %766
        %768 = vrot.lane.b32.xlu0 %v673, 8
        %v769 = vpop.permute.xlu0 %768
        %770 = vrot.lane.b32.xlu0 %v675, 8
        %v771 = vpop.permute.xlu0 %770
        %772 = vrot.lane.b32.xlu0 %v677, 8
        %v773 = vpop.permute.xlu0 %772
        %774 = vrot.lane.b32.xlu0 %v679, 8
        %v775 = vpop.permute.xlu0 %774
        %776 = vrot.lane.b32.xlu0 %v681, 8
        %v777 = vpop.permute.xlu0 %776
        %778 = vrot.lane.b32.xlu0 %v683, 8
        %v779 = vpop.permute.xlu0 %778
        %780 = vrot.lane.b32.xlu0 %v685, 8
        %v781 = vpop.permute.xlu0 %780
        %782 = vrot.lane.b32.xlu0 %v687, 8
        %v783 = vpop.permute.xlu0 %782
        %784 = vrot.lane.b32.xlu0 %v689, 8
        %v785 = vpop.permute.xlu0 %784
        %786 = vrot.lane.b32.xlu0 %v691, 8
        %v787 = vpop.permute.xlu0 %786
        %788 = vrot.lane.b32.xlu0 %v693, 8
        %v789 = vpop.permute.xlu0 %788
        %790 = vrot.lane.b32.xlu0 %v695, 8
        %v791 = vpop.permute.xlu0 %790
        %792 = vrot.lane.b32.xlu0 %v697, 8
        %v793 = vpop.permute.xlu0 %792
        %794 = vrot.lane.b32.xlu0 %v699, 8
        %v795 = vpop.permute.xlu0 %794
        %796 = vrot.lane.b32.xlu0 %v701, 8
        %v797 = vpop.permute.xlu0 %796
        %798 = vrot.lane.b32.xlu0 %v703, 8
        %v799 = vpop.permute.xlu0 %798
        %800 = vrot.lane.b32.xlu0 %v705, 8
        %v801 = vpop.permute.xlu0 %800
        %802 = vrot.lane.b32.xlu0 %v707, 8
        %v803 = vpop.permute.xlu0 %802
        %804 = vrot.lane.b32.xlu0 %v709, 8
        %v805 = vpop.permute.xlu0 %804
        %806 = vrot.lane.b32.xlu0 %v711, 8
        %v807 = vpop.permute.xlu0 %806
        %808 = vrot.lane.b32.xlu0 %v713, 8
        %v809 = vpop.permute.xlu0 %808
        %810 = vrot.lane.b32.xlu0 %v715, 8
        %v811 = vpop.permute.xlu0 %810
        %812 = vrot.lane.b32.xlu0 %v717, 8
        %v813 = vpop.permute.xlu0 %812
        %814 = vrot.lane.b32.xlu0 %v719, 8
        %v815 = vpop.permute.xlu0 %814
        %816 = vrot.lane.b32.xlu0 %v721, 8
        %v817 = vpop.permute.xlu0 %816
        %818 = vrot.lane.b32.xlu0 %v723, 8
        %v819 = vpop.permute.xlu0 %818
        %820 = vrot.lane.b32.xlu0 %v725, 8
        %v821 = vpop.permute.xlu0 %820
        %822 = vrot.lane.b32.xlu0 %v727, 8
        %v823 = vpop.permute.xlu0 %822
        %824 = vrot.lane.b32.xlu0 %v729, 8
        %v825 = vpop.permute.xlu0 %824
        %826 = vrot.lane.b32.xlu0 %v731, 8
        %v827 = vpop.permute.xlu0 %826
        %828 = vrot.lane.b32.xlu0 %v733, 8
        %v829 = vpop.permute.xlu0 %828
        %830 = vrot.lane.b32.xlu0 %v735, 8
        %v831 = vpop.permute.xlu0 %830
        %832 = vrot.lane.b32.xlu0 %v737, 8
        %v833 = vpop.permute.xlu0 %832
        %834 = vrot.lane.b32.xlu0 %v739, 8
        %v835 = vpop.permute.xlu0 %834
        %836 = vrot.lane.b32.xlu0 %v741, 8
        %v837 = vpop.permute.xlu0 %836
        %838 = vrot.lane.b32.xlu0 %v743, 8
        %v839 = vpop.permute.xlu0 %838
        %840 = vrot.lane.b32.xlu0 %v745, 8
        %v841 = vpop.permute.xlu0 %840
        %842 = vrot.lane.b32.xlu0 %v747, 8
        %v843 = vpop.permute.xlu0 %842
        %844 = vrot.lane.b32.xlu0 %v749, 8
        %v845 = vpop.permute.xlu0 %844
        %942 = vrot.lane.b32.xlu0 %v262, 12
        %v943 = vpop.permute.xlu0 %942
        %944 = vrot.lane.b32.xlu0 %v263, 12
        %v945 = vpop.permute.xlu0 %944
        %946 = vrot.lane.b32.xlu0 %v264, 12
        %v947 = vpop.permute.xlu0 %946
        %948 = vrot.lane.b32.xlu0 %v265, 12
        %v949 = vpop.permute.xlu0 %948
        %950 = vrot.lane.b32.xlu0 %v266, 12
        %v951 = vpop.permute.xlu0 %950
        %952 = vrot.lane.b32.xlu0 %v267, 12
        %v953 = vpop.permute.xlu0 %952
        %954 = vrot.lane.b32.xlu0 %v268, 12
        %v955 = vpop.permute.xlu0 %954
        %956 = vrot.lane.b32.xlu0 %v269, 12
        %v957 = vpop.permute.xlu0 %956
        %958 = vrot.lane.b32.xlu0 %v270, 12
        %v959 = vpop.permute.xlu0 %958
        %960 = vrot.lane.b32.xlu0 %v271, 12
        %v961 = vpop.permute.xlu0 %960
        %962 = vrot.lane.b32.xlu0 %v272, 12
        %v963 = vpop.permute.xlu0 %962
        %964 = vrot.lane.b32.xlu0 %v273, 12
        %v965 = vpop.permute.xlu0 %964
        %966 = vrot.lane.b32.xlu0 %v274, 12
        %v967 = vpop.permute.xlu0 %966
        %968 = vrot.lane.b32.xlu0 %v275, 12
        %v969 = vpop.permute.xlu0 %968
        %970 = vrot.lane.b32.xlu0 %v276, 12
        %v971 = vpop.permute.xlu0 %970
        %972 = vrot.lane.b32.xlu0 %v277, 12
        %v973 = vpop.permute.xlu0 %972
        %974 = vrot.lane.b32.xlu0 %v278, 12
        %v975 = vpop.permute.xlu0 %974
        %976 = vrot.lane.b32.xlu0 %v279, 12
        %v977 = vpop.permute.xlu0 %976
        %978 = vrot.lane.b32.xlu0 %v280, 12
        %v979 = vpop.permute.xlu0 %978
        %980 = vrot.lane.b32.xlu0 %v281, 12
        %v981 = vpop.permute.xlu0 %980
        %982 = vrot.lane.b32.xlu0 %v282, 12
        %v983 = vpop.permute.xlu0 %982
        %984 = vrot.lane.b32.xlu0 %v283, 12
        %v985 = vpop.permute.xlu0 %984
        %986 = vrot.lane.b32.xlu0 %v284, 12
        %v987 = vpop.permute.xlu0 %986
        %988 = vrot.lane.b32.xlu0 %v285, 12
        %v989 = vpop.permute.xlu0 %988
        %990 = vrot.lane.b32.xlu0 %v286, 12
        %v991 = vpop.permute.xlu0 %990
        %992 = vrot.lane.b32.xlu0 %v287, 12
        %v993 = vpop.permute.xlu0 %992
        %994 = vrot.lane.b32.xlu0 %v288, 12
        %v995 = vpop.permute.xlu0 %994
        %996 = vrot.lane.b32.xlu0 %v289, 12
        %v997 = vpop.permute.xlu0 %996
        %998 = vrot.lane.b32.xlu0 %v290, 12
        %v999 = vpop.permute.xlu0 %998
        %1000 = vrot.lane.b32.xlu0 %v291, 12
        %v1001 = vpop.permute.xlu0 %1000
        %1002 = vrot.lane.b32.xlu0 %v292, 12
        %v1003 = vpop.permute.xlu0 %1002
        %1004 = vrot.lane.b32.xlu0 %v293, 12
        %v1005 = vpop.permute.xlu0 %1004
        %1006 = vrot.lane.b32.xlu0 %v294, 12
        %v1007 = vpop.permute.xlu0 %1006
        %1008 = vrot.lane.b32.xlu0 %v295, 12
        %v1009 = vpop.permute.xlu0 %1008
        %1010 = vrot.lane.b32.xlu0 %v296, 12
        %v1011 = vpop.permute.xlu0 %1010
        %1012 = vrot.lane.b32.xlu0 %v297, 12
        %v1013 = vpop.permute.xlu0 %1012
        %1014 = vrot.lane.b32.xlu0 %v298, 12
        %v1015 = vpop.permute.xlu0 %1014
        %1016 = vrot.lane.b32.xlu0 %v299, 12
        %v1017 = vpop.permute.xlu0 %1016
        %1018 = vrot.lane.b32.xlu0 %v300, 12
        %v1019 = vpop.permute.xlu0 %1018
        %1020 = vrot.lane.b32.xlu0 %v301, 12
        %v1021 = vpop.permute.xlu0 %1020
        %1022 = vrot.lane.b32.xlu0 %v302, 12
        %v1023 = vpop.permute.xlu0 %1022
        %1024 = vrot.lane.b32.xlu0 %v303, 12
        %v1025 = vpop.permute.xlu0 %1024
        %1026 = vrot.lane.b32.xlu0 %v304, 12
        %v1027 = vpop.permute.xlu0 %1026
        %1028 = vrot.lane.b32.xlu0 %v305, 12
        %v1029 = vpop.permute.xlu0 %1028
        %1030 = vrot.lane.b32.xlu0 %v306, 12
        %v1031 = vpop.permute.xlu0 %1030
        %1032 = vrot.lane.b32.xlu0 %v307, 12
        %v1033 = vpop.permute.xlu0 %1032
        %1034 = vrot.lane.b32.xlu0 %v308, 12
        %v1035 = vpop.permute.xlu0 %1034
        %1036 = vrot.lane.b32.xlu0 %v309, 12
        %v1037 = vpop.permute.xlu0 %1036
        %v1087 = vrot.slane %v262, 1
        %v1088 = vrot.slane %v263, 1
        %v1089 = vsel %vm410, %v1087, %v1088
        %v1090 = vrot.slane %v264, 1
        %v1091 = vsel %vm410, %v1088, %v1090
        %v1092 = vrot.slane %v265, 1
        %v1093 = vsel %vm410, %v1090, %v1092
        %v1094 = vrot.slane %v266, 1
        %v1095 = vsel %vm410, %v1092, %v1094
        %v1096 = vrot.slane %v267, 1
        %v1097 = vsel %vm410, %v1094, %v1096
        %v1098 = vrot.slane %v268, 1
        %v1099 = vsel %vm410, %v1096, %v1098
        %v1100 = vrot.slane %v269, 1
        %v1101 = vsel %vm410, %v1098, %v1100
        %v1102 = vrot.slane %v270, 1
        %v1103 = vsel %vm410, %v1100, %v1102
        %v1104 = vrot.slane %v271, 1
        %v1105 = vsel %vm410, %v1102, %v1104
        %v1106 = vrot.slane %v272, 1
        %v1107 = vsel %vm410, %v1104, %v1106
        %v1108 = vrot.slane %v273, 1
        %v1109 = vsel %vm410, %v1106, %v1108
        %v1110 = vrot.slane %v274, 1
        %v1111 = vsel %vm410, %v1108, %v1110
        %v1112 = vrot.slane %v275, 1
        %v1113 = vsel %vm410, %v1110, %v1112
        %v1114 = vrot.slane %v276, 1
        %v1115 = vsel %vm410, %v1112, %v1114
        %v1116 = vrot.slane %v277, 1
        %v1117 = vsel %vm410, %v1114, %v1116
        %v1118 = vrot.slane %v278, 1
        %v1119 = vsel %vm410, %v1116, %v1118
        %v1120 = vrot.slane %v279, 1
        %v1121 = vsel %vm410, %v1118, %v1120
        %v1122 = vrot.slane %v280, 1
        %v1123 = vsel %vm410, %v1120, %v1122
        %v1124 = vrot.slane %v281, 1
        %v1125 = vsel %vm410, %v1122, %v1124
        %v1126 = vrot.slane %v282, 1
        %v1127 = vsel %vm410, %v1124, %v1126
        %v1128 = vrot.slane %v283, 1
        %v1129 = vsel %vm410, %v1126, %v1128
        %v1130 = vrot.slane %v284, 1
        %v1131 = vsel %vm410, %v1128, %v1130
        %v1132 = vrot.slane %v285, 1
        %v1133 = vsel %vm410, %v1130, %v1132
        %v1134 = vrot.slane %v286, 1
        %v1135 = vsel %vm410, %v1132, %v1134
        %v1136 = vrot.slane %v287, 1
        %v1137 = vsel %vm410, %v1134, %v1136
        %v1138 = vrot.slane %v288, 1
        %v1139 = vsel %vm410, %v1136, %v1138
        %v1140 = vrot.slane %v289, 1
        %v1141 = vsel %vm410, %v1138, %v1140
        %v1142 = vrot.slane %v290, 1
        %v1143 = vsel %vm410, %v1140, %v1142
        %v1144 = vrot.slane %v291, 1
        %v1145 = vsel %vm410, %v1142, %v1144
        %v1146 = vrot.slane %v292, 1
        %v1147 = vsel %vm410, %v1144, %v1146
        %v1148 = vrot.slane %v293, 1
        %v1149 = vsel %vm410, %v1146, %v1148
        %v1150 = vrot.slane %v294, 1
        %v1151 = vsel %vm410, %v1148, %v1150
        %v1152 = vrot.slane %v295, 1
        %v1153 = vsel %vm410, %v1150, %v1152
        %v1154 = vrot.slane %v296, 1
        %v1155 = vsel %vm410, %v1152, %v1154
        %v1156 = vrot.slane %v297, 1
        %v1157 = vsel %vm410, %v1154, %v1156
        %v1158 = vrot.slane %v298, 1
        %v1159 = vsel %vm410, %v1156, %v1158
        %v1160 = vrot.slane %v299, 1
        %v1161 = vsel %vm410, %v1158, %v1160
        %v1162 = vrot.slane %v300, 1
        %v1163 = vsel %vm410, %v1160, %v1162
        %v1164 = vrot.slane %v301, 1
        %v1165 = vsel %vm410, %v1162, %v1164
        %v1166 = vrot.slane %v302, 1
        %v1167 = vsel %vm410, %v1164, %v1166
        %v1168 = vrot.slane %v303, 1
        %v1169 = vsel %vm410, %v1166, %v1168
        %v1170 = vrot.slane %v304, 1
        %v1171 = vsel %vm410, %v1168, %v1170
        %v1172 = vrot.slane %v305, 1
        %v1173 = vsel %vm410, %v1170, %v1172
        %v1174 = vrot.slane %v306, 1
        %v1175 = vsel %vm410, %v1172, %v1174
        %v1176 = vrot.slane %v307, 1
        %v1177 = vsel %vm410, %v1174, %v1176
        %v1178 = vrot.slane %v308, 1
        %v1179 = vsel %vm410, %v1176, %v1178
        %v1180 = vrot.slane %v309, 1
        %v1181 = vsel %vm410, %v1178, %v1180
        %v1182 = vrot.slane %v310, 1
        %v1183 = vsel %vm410, %v1180, %v1182
        %1184 = vrot.lane.b32.xlu0 %v1089, 16
        %v1185 = vpop.permute.xlu0 %1184
        %1186 = vrot.lane.b32.xlu0 %v1091, 16
        %v1187 = vpop.permute.xlu0 %1186
        %1188 = vrot.lane.b32.xlu0 %v1093, 16
        %v1189 = vpop.permute.xlu0 %1188
        %1190 = vrot.lane.b32.xlu0 %v1095, 16
        %v1191 = vpop.permute.xlu0 %1190
        %1192 = vrot.lane.b32.xlu0 %v1097, 16
        %v1193 = vpop.permute.xlu0 %1192
        %1194 = vrot.lane.b32.xlu0 %v1099, 16
        %v1195 = vpop.permute.xlu0 %1194
        %1196 = vrot.lane.b32.xlu0 %v1101, 16
        %v1197 = vpop.permute.xlu0 %1196
        %1198 = vrot.lane.b32.xlu0 %v1103, 16
        %v1199 = vpop.permute.xlu0 %1198
        %1200 = vrot.lane.b32.xlu0 %v1105, 16
        %v1201 = vpop.permute.xlu0 %1200
        %1202 = vrot.lane.b32.xlu0 %v1107, 16
        %v1203 = vpop.permute.xlu0 %1202
        %1204 = vrot.lane.b32.xlu0 %v1109, 16
        %v1205 = vpop.permute.xlu0 %1204
        %1206 = vrot.lane.b32.xlu0 %v1111, 16
        %v1207 = vpop.permute.xlu0 %1206
        %1208 = vrot.lane.b32.xlu0 %v1113, 16
        %v1209 = vpop.permute.xlu0 %1208
        %1210 = vrot.lane.b32.xlu0 %v1115, 16
        %v1211 = vpop.permute.xlu0 %1210
        %1212 = vrot.lane.b32.xlu0 %v1117, 16
        %v1213 = vpop.permute.xlu0 %1212
        %1214 = vrot.lane.b32.xlu0 %v1119, 16
        %v1215 = vpop.permute.xlu0 %1214
        %1216 = vrot.lane.b32.xlu0 %v1121, 16
        %v1217 = vpop.permute.xlu0 %1216
        %1218 = vrot.lane.b32.xlu0 %v1123, 16
        %v1219 = vpop.permute.xlu0 %1218
        %1220 = vrot.lane.b32.xlu0 %v1125, 16
        %v1221 = vpop.permute.xlu0 %1220
        %1222 = vrot.lane.b32.xlu0 %v1127, 16
        %v1223 = vpop.permute.xlu0 %1222
        %1224 = vrot.lane.b32.xlu0 %v1129, 16
        %v1225 = vpop.permute.xlu0 %1224
        %1226 = vrot.lane.b32.xlu0 %v1131, 16
        %v1227 = vpop.permute.xlu0 %1226
        %1228 = vrot.lane.b32.xlu0 %v1133, 16
        %v1229 = vpop.permute.xlu0 %1228
        %1230 = vrot.lane.b32.xlu0 %v1135, 16
        %v1231 = vpop.permute.xlu0 %1230
        %1232 = vrot.lane.b32.xlu0 %v1137, 16
        %v1233 = vpop.permute.xlu0 %1232
        %1234 = vrot.lane.b32.xlu0 %v1139, 16
        %v1235 = vpop.permute.xlu0 %1234
        %1236 = vrot.lane.b32.xlu0 %v1141, 16
        %v1237 = vpop.permute.xlu0 %1236
        %1238 = vrot.lane.b32.xlu0 %v1143, 16
        %v1239 = vpop.permute.xlu0 %1238
        %1240 = vrot.lane.b32.xlu0 %v1145, 16
        %v1241 = vpop.permute.xlu0 %1240
        %1242 = vrot.lane.b32.xlu0 %v1147, 16
        %v1243 = vpop.permute.xlu0 %1242
        %1244 = vrot.lane.b32.xlu0 %v1149, 16
        %v1245 = vpop.permute.xlu0 %1244
        %1246 = vrot.lane.b32.xlu0 %v1151, 16
        %v1247 = vpop.permute.xlu0 %1246
        %1248 = vrot.lane.b32.xlu0 %v1153, 16
        %v1249 = vpop.permute.xlu0 %1248
        %1250 = vrot.lane.b32.xlu0 %v1155, 16
        %v1251 = vpop.permute.xlu0 %1250
        %1252 = vrot.lane.b32.xlu0 %v1157, 16
        %v1253 = vpop.permute.xlu0 %1252
        %1254 = vrot.lane.b32.xlu0 %v1159, 16
        %v1255 = vpop.permute.xlu0 %1254
        %1256 = vrot.lane.b32.xlu0 %v1161, 16
        %v1257 = vpop.permute.xlu0 %1256
        %1258 = vrot.lane.b32.xlu0 %v1163, 16
        %v1259 = vpop.permute.xlu0 %1258
        %1260 = vrot.lane.b32.xlu0 %v1165, 16
        %v1261 = vpop.permute.xlu0 %1260
        %1262 = vrot.lane.b32.xlu0 %v1167, 16
        %v1263 = vpop.permute.xlu0 %1262
        %1264 = vrot.lane.b32.xlu0 %v1169, 16
        %v1265 = vpop.permute.xlu0 %1264
        %1266 = vrot.lane.b32.xlu0 %v1171, 16
        %v1267 = vpop.permute.xlu0 %1266
        %1268 = vrot.lane.b32.xlu0 %v1173, 16
        %v1269 = vpop.permute.xlu0 %1268
        %1270 = vrot.lane.b32.xlu0 %v1175, 16
        %v1271 = vpop.permute.xlu0 %1270
        %1272 = vrot.lane.b32.xlu0 %v1177, 16
        %v1273 = vpop.permute.xlu0 %1272
        %1274 = vrot.lane.b32.xlu0 %v1179, 16
        %v1275 = vpop.permute.xlu0 %1274
        %1276 = vrot.lane.b32.xlu0 %v1181, 16
        %v1277 = vpop.permute.xlu0 %1276
        %1278 = vrot.lane.b32.xlu0 %v1183, 16
        %v1279 = vpop.permute.xlu0 %1278
        %v1328 = vrot.slane %v262, 2
        %v1329 = vrot.slane %v263, 2
        %v1330 = vsel %vm652, %v1328, %v1329
        %v1331 = vrot.slane %v264, 2
        %v1332 = vsel %vm652, %v1329, %v1331
        %v1333 = vrot.slane %v265, 2
        %v1334 = vsel %vm652, %v1331, %v1333
        %v1335 = vrot.slane %v266, 2
        %v1336 = vsel %vm652, %v1333, %v1335
        %v1337 = vrot.slane %v267, 2
        %v1338 = vsel %vm652, %v1335, %v1337
        %v1339 = vrot.slane %v268, 2
        %v1340 = vsel %vm652, %v1337, %v1339
        %v1341 = vrot.slane %v269, 2
        %v1342 = vsel %vm652, %v1339, %v1341
        %v1343 = vrot.slane %v270, 2
        %v1344 = vsel %vm652, %v1341, %v1343
        %v1345 = vrot.slane %v271, 2
        %v1346 = vsel %vm652, %v1343, %v1345
        %v1347 = vrot.slane %v272, 2
        %v1348 = vsel %vm652, %v1345, %v1347
        %v1349 = vrot.slane %v273, 2
        %v1350 = vsel %vm652, %v1347, %v1349
        %v1351 = vrot.slane %v274, 2
        %v1352 = vsel %vm652, %v1349, %v1351
        %v1353 = vrot.slane %v275, 2
        %v1354 = vsel %vm652, %v1351, %v1353
        %v1355 = vrot.slane %v276, 2
        %v1356 = vsel %vm652, %v1353, %v1355
        %v1357 = vrot.slane %v277, 2
        %v1358 = vsel %vm652, %v1355, %v1357
        %v1359 = vrot.slane %v278, 2
        %v1360 = vsel %vm652, %v1357, %v1359
        %v1361 = vrot.slane %v279, 2
        %v1362 = vsel %vm652, %v1359, %v1361
        %v1363 = vrot.slane %v280, 2
        %v1364 = vsel %vm652, %v1361, %v1363
        %v1365 = vrot.slane %v281, 2
        %v1366 = vsel %vm652, %v1363, %v1365
        %v1367 = vrot.slane %v282, 2
        %v1368 = vsel %vm652, %v1365, %v1367
        %v1369 = vrot.slane %v283, 2
        %v1370 = vsel %vm652, %v1367, %v1369
        %v1371 = vrot.slane %v284, 2
        %v1372 = vsel %vm652, %v1369, %v1371
        %v1373 = vrot.slane %v285, 2
        %v1374 = vsel %vm652, %v1371, %v1373
        %v1375 = vrot.slane %v286, 2
        %v1376 = vsel %vm652, %v1373, %v1375
        %v1377 = vrot.slane %v287, 2
        %v1378 = vsel %vm652, %v1375, %v1377
        %v1379 = vrot.slane %v288, 2
        %v1380 = vsel %vm652, %v1377, %v1379
        %v1381 = vrot.slane %v289, 2
        %v1382 = vsel %vm652, %v1379, %v1381
        %v1383 = vrot.slane %v290, 2
        %v1384 = vsel %vm652, %v1381, %v1383
        %v1385 = vrot.slane %v291, 2
        %v1386 = vsel %vm652, %v1383, %v1385
        %v1387 = vrot.slane %v292, 2
        %v1388 = vsel %vm652, %v1385, %v1387
        %v1389 = vrot.slane %v293, 2
        %v1390 = vsel %vm652, %v1387, %v1389
        %v1391 = vrot.slane %v294, 2
        %v1392 = vsel %vm652, %v1389, %v1391
        %v1393 = vrot.slane %v295, 2
        %v1394 = vsel %vm652, %v1391, %v1393
        %v1395 = vrot.slane %v296, 2
        %v1396 = vsel %vm652, %v1393, %v1395
        %v1397 = vrot.slane %v297, 2
        %v1398 = vsel %vm652, %v1395, %v1397
        %v1399 = vrot.slane %v298, 2
        %v1400 = vsel %vm652, %v1397, %v1399
        %v1401 = vrot.slane %v299, 2
        %v1402 = vsel %vm652, %v1399, %v1401
        %v1403 = vrot.slane %v300, 2
        %v1404 = vsel %vm652, %v1401, %v1403
        %v1405 = vrot.slane %v301, 2
        %v1406 = vsel %vm652, %v1403, %v1405
        %v1407 = vrot.slane %v302, 2
        %v1408 = vsel %vm652, %v1405, %v1407
        %v1409 = vrot.slane %v303, 2
        %v1410 = vsel %vm652, %v1407, %v1409
        %v1411 = vrot.slane %v304, 2
        %v1412 = vsel %vm652, %v1409, %v1411
        %v1413 = vrot.slane %v305, 2
        %v1414 = vsel %vm652, %v1411, %v1413
        %v1415 = vrot.slane %v306, 2
        %v1416 = vsel %vm652, %v1413, %v1415
        %v1417 = vrot.slane %v307, 2
        %v1418 = vsel %vm652, %v1415, %v1417
        %v1419 = vrot.slane %v308, 2
        %v1420 = vsel %vm652, %v1417, %v1419
        %v1421 = vrot.slane %v309, 2
        %v1422 = vsel %vm652, %v1419, %v1421
        %v1423 = vrot.slane %v310, 2
        %v1424 = vsel %vm652, %v1421, %v1423
        %1425 = vrot.lane.b32.xlu0 %v1330, 20
        %v1426 = vpop.permute.xlu0 %1425
        %1427 = vrot.lane.b32.xlu0 %v1332, 20
        %v1428 = vpop.permute.xlu0 %1427
        %1429 = vrot.lane.b32.xlu0 %v1334, 20
        %v1430 = vpop.permute.xlu0 %1429
        %1431 = vrot.lane.b32.xlu0 %v1336, 20
        %v1432 = vpop.permute.xlu0 %1431
        %1433 = vrot.lane.b32.xlu0 %v1338, 20
        %v1434 = vpop.permute.xlu0 %1433
        %1435 = vrot.lane.b32.xlu0 %v1340, 20
        %v1436 = vpop.permute.xlu0 %1435
        %1437 = vrot.lane.b32.xlu0 %v1342, 20
        %v1438 = vpop.permute.xlu0 %1437
        %1439 = vrot.lane.b32.xlu0 %v1344, 20
        %v1440 = vpop.permute.xlu0 %1439
        %1441 = vrot.lane.b32.xlu0 %v1346, 20
        %v1442 = vpop.permute.xlu0 %1441
        %1443 = vrot.lane.b32.xlu0 %v1348, 20
        %v1444 = vpop.permute.xlu0 %1443
        %1445 = vrot.lane.b32.xlu0 %v1350, 20
        %v1446 = vpop.permute.xlu0 %1445
        %1447 = vrot.lane.b32.xlu0 %v1352, 20
        %v1448 = vpop.permute.xlu0 %1447
        %1449 = vrot.lane.b32.xlu0 %v1354, 20
        %v1450 = vpop.permute.xlu0 %1449
        %1451 = vrot.lane.b32.xlu0 %v1356, 20
        %v1452 = vpop.permute.xlu0 %1451
        %1453 = vrot.lane.b32.xlu0 %v1358, 20
        %v1454 = vpop.permute.xlu0 %1453
        %1455 = vrot.lane.b32.xlu0 %v1360, 20
        %v1456 = vpop.permute.xlu0 %1455
        %1457 = vrot.lane.b32.xlu0 %v1362, 20
        %v1458 = vpop.permute.xlu0 %1457
        %1459 = vrot.lane.b32.xlu0 %v1364, 20
        %v1460 = vpop.permute.xlu0 %1459
        %1461 = vrot.lane.b32.xlu0 %v1366, 20
        %v1462 = vpop.permute.xlu0 %1461
        %1463 = vrot.lane.b32.xlu0 %v1368, 20
        %v1464 = vpop.permute.xlu0 %1463
        %1465 = vrot.lane.b32.xlu0 %v1370, 20
        %v1466 = vpop.permute.xlu0 %1465
        %1467 = vrot.lane.b32.xlu0 %v1372, 20
        %v1468 = vpop.permute.xlu0 %1467
        %1469 = vrot.lane.b32.xlu0 %v1374, 20
        %v1470 = vpop.permute.xlu0 %1469
        %1471 = vrot.lane.b32.xlu0 %v1376, 20
        %v1472 = vpop.permute.xlu0 %1471
        %1473 = vrot.lane.b32.xlu0 %v1378, 20
        %v1474 = vpop.permute.xlu0 %1473
        %1475 = vrot.lane.b32.xlu0 %v1380, 20
        %v1476 = vpop.permute.xlu0 %1475
        %1477 = vrot.lane.b32.xlu0 %v1382, 20
        %v1478 = vpop.permute.xlu0 %1477
        %1479 = vrot.lane.b32.xlu0 %v1384, 20
        %v1480 = vpop.permute.xlu0 %1479
        %1481 = vrot.lane.b32.xlu0 %v1386, 20
        %v1482 = vpop.permute.xlu0 %1481
        %1483 = vrot.lane.b32.xlu0 %v1388, 20
        %v1484 = vpop.permute.xlu0 %1483
        %1485 = vrot.lane.b32.xlu0 %v1390, 20
        %v1486 = vpop.permute.xlu0 %1485
        %1487 = vrot.lane.b32.xlu0 %v1392, 20
        %v1488 = vpop.permute.xlu0 %1487
        %1489 = vrot.lane.b32.xlu0 %v1394, 20
        %v1490 = vpop.permute.xlu0 %1489
        %1491 = vrot.lane.b32.xlu0 %v1396, 20
        %v1492 = vpop.permute.xlu0 %1491
        %1493 = vrot.lane.b32.xlu0 %v1398, 20
        %v1494 = vpop.permute.xlu0 %1493
        %1495 = vrot.lane.b32.xlu0 %v1400, 20
        %v1496 = vpop.permute.xlu0 %1495
        %1497 = vrot.lane.b32.xlu0 %v1402, 20
        %v1498 = vpop.permute.xlu0 %1497
        %1499 = vrot.lane.b32.xlu0 %v1404, 20
        %v1500 = vpop.permute.xlu0 %1499
        %1501 = vrot.lane.b32.xlu0 %v1406, 20
        %v1502 = vpop.permute.xlu0 %1501
        %1503 = vrot.lane.b32.xlu0 %v1408, 20
        %v1504 = vpop.permute.xlu0 %1503
        %1505 = vrot.lane.b32.xlu0 %v1410, 20
        %v1506 = vpop.permute.xlu0 %1505
        %1507 = vrot.lane.b32.xlu0 %v1412, 20
        %v1508 = vpop.permute.xlu0 %1507
        %1509 = vrot.lane.b32.xlu0 %v1414, 20
        %v1510 = vpop.permute.xlu0 %1509
        %1511 = vrot.lane.b32.xlu0 %v1416, 20
        %v1512 = vpop.permute.xlu0 %1511
        %1513 = vrot.lane.b32.xlu0 %v1418, 20
        %v1514 = vpop.permute.xlu0 %1513
        %1515 = vrot.lane.b32.xlu0 %v1420, 20
        %v1516 = vpop.permute.xlu0 %1515
        %1517 = vrot.lane.b32.xlu0 %v1422, 20
        %v1518 = vpop.permute.xlu0 %1517
        %1519 = vrot.lane.b32.xlu0 %v1424, 20
        %v1520 = vpop.permute.xlu0 %1519
        %1617 = vrot.lane.b32.xlu0 %v312, 24
        %v1618 = vpop.permute.xlu0 %1617
        %1619 = vrot.lane.b32.xlu0 %v313, 24
        %v1620 = vpop.permute.xlu0 %1619
        %1621 = vrot.lane.b32.xlu0 %v314, 24
        %v1622 = vpop.permute.xlu0 %1621
        %1623 = vrot.lane.b32.xlu0 %v315, 24
        %v1624 = vpop.permute.xlu0 %1623
        %1625 = vrot.lane.b32.xlu0 %v316, 24
        %v1626 = vpop.permute.xlu0 %1625
        %1627 = vrot.lane.b32.xlu0 %v317, 24
        %v1628 = vpop.permute.xlu0 %1627
        %1629 = vrot.lane.b32.xlu0 %v318, 24
        %v1630 = vpop.permute.xlu0 %1629
        %1631 = vrot.lane.b32.xlu0 %v319, 24
        %v1632 = vpop.permute.xlu0 %1631
        %1633 = vrot.lane.b32.xlu0 %v320, 24
        %v1634 = vpop.permute.xlu0 %1633
        %1635 = vrot.lane.b32.xlu0 %v321, 24
        %v1636 = vpop.permute.xlu0 %1635
        %1637 = vrot.lane.b32.xlu0 %v322, 24
        %v1638 = vpop.permute.xlu0 %1637
        %1639 = vrot.lane.b32.xlu0 %v323, 24
        %v1640 = vpop.permute.xlu0 %1639
        %1641 = vrot.lane.b32.xlu0 %v324, 24
        %v1642 = vpop.permute.xlu0 %1641
        %1643 = vrot.lane.b32.xlu0 %v325, 24
        %v1644 = vpop.permute.xlu0 %1643
        %1645 = vrot.lane.b32.xlu0 %v326, 24
        %v1646 = vpop.permute.xlu0 %1645
        %1647 = vrot.lane.b32.xlu0 %v327, 24
        %v1648 = vpop.permute.xlu0 %1647
        %1649 = vrot.lane.b32.xlu0 %v328, 24
        %v1650 = vpop.permute.xlu0 %1649
        %1651 = vrot.lane.b32.xlu0 %v329, 24
        %v1652 = vpop.permute.xlu0 %1651
        %1653 = vrot.lane.b32.xlu0 %v330, 24
        %v1654 = vpop.permute.xlu0 %1653
        %1655 = vrot.lane.b32.xlu0 %v331, 24
        %v1656 = vpop.permute.xlu0 %1655
        %1657 = vrot.lane.b32.xlu0 %v332, 24
        %v1658 = vpop.permute.xlu0 %1657
        %1659 = vrot.lane.b32.xlu0 %v333, 24
        %v1660 = vpop.permute.xlu0 %1659
        %1661 = vrot.lane.b32.xlu0 %v334, 24
        %v1662 = vpop.permute.xlu0 %1661
        %1663 = vrot.lane.b32.xlu0 %v335, 24
        %v1664 = vpop.permute.xlu0 %1663
        %1665 = vrot.lane.b32.xlu0 %v336, 24
        %v1666 = vpop.permute.xlu0 %1665
        %1667 = vrot.lane.b32.xlu0 %v337, 24
        %v1668 = vpop.permute.xlu0 %1667
        %1669 = vrot.lane.b32.xlu0 %v338, 24
        %v1670 = vpop.permute.xlu0 %1669
        %1671 = vrot.lane.b32.xlu0 %v339, 24
        %v1672 = vpop.permute.xlu0 %1671
        %1673 = vrot.lane.b32.xlu0 %v340, 24
        %v1674 = vpop.permute.xlu0 %1673
        %1675 = vrot.lane.b32.xlu0 %v341, 24
        %v1676 = vpop.permute.xlu0 %1675
        %1677 = vrot.lane.b32.xlu0 %v342, 24
        %v1678 = vpop.permute.xlu0 %1677
        %1679 = vrot.lane.b32.xlu0 %v343, 24
        %v1680 = vpop.permute.xlu0 %1679
        %1681 = vrot.lane.b32.xlu0 %v344, 24
        %v1682 = vpop.permute.xlu0 %1681
        %1683 = vrot.lane.b32.xlu0 %v345, 24
        %v1684 = vpop.permute.xlu0 %1683
        %1685 = vrot.lane.b32.xlu0 %v346, 24
        %v1686 = vpop.permute.xlu0 %1685
        %1687 = vrot.lane.b32.xlu0 %v347, 24
        %v1688 = vpop.permute.xlu0 %1687
        %1689 = vrot.lane.b32.xlu0 %v348, 24
        %v1690 = vpop.permute.xlu0 %1689
        %1691 = vrot.lane.b32.xlu0 %v349, 24
        %v1692 = vpop.permute.xlu0 %1691
        %1693 = vrot.lane.b32.xlu0 %v350, 24
        %v1694 = vpop.permute.xlu0 %1693
        %1695 = vrot.lane.b32.xlu0 %v351, 24
        %v1696 = vpop.permute.xlu0 %1695
        %1697 = vrot.lane.b32.xlu0 %v352, 24
        %v1698 = vpop.permute.xlu0 %1697
        %1699 = vrot.lane.b32.xlu0 %v353, 24
        %v1700 = vpop.permute.xlu0 %1699
        %1701 = vrot.lane.b32.xlu0 %v354, 24
        %v1702 = vpop.permute.xlu0 %1701
        %1703 = vrot.lane.b32.xlu0 %v355, 24
        %v1704 = vpop.permute.xlu0 %1703
        %1705 = vrot.lane.b32.xlu0 %v356, 24
        %v1706 = vpop.permute.xlu0 %1705
        %1707 = vrot.lane.b32.xlu0 %v357, 24
        %v1708 = vpop.permute.xlu0 %1707
        %1709 = vrot.lane.b32.xlu0 %v358, 24
        %v1710 = vpop.permute.xlu0 %1709
        %1711 = vrot.lane.b32.xlu0 %v359, 24
        %v1712 = vpop.permute.xlu0 %1711
        %v1762 = vrot.slane %v312, 1
        %v1763 = vrot.slane %v313, 1
        %v1764 = vsel %vm410, %v1762, %v1763
        %v1765 = vrot.slane %v314, 1
        %v1766 = vsel %vm410, %v1763, %v1765
        %v1767 = vrot.slane %v315, 1
        %v1768 = vsel %vm410, %v1765, %v1767
        %v1769 = vrot.slane %v316, 1
        %v1770 = vsel %vm410, %v1767, %v1769
        %v1771 = vrot.slane %v317, 1
        %v1772 = vsel %vm410, %v1769, %v1771
        %v1773 = vrot.slane %v318, 1
        %v1774 = vsel %vm410, %v1771, %v1773
        %v1775 = vrot.slane %v319, 1
        %v1776 = vsel %vm410, %v1773, %v1775
        %v1777 = vrot.slane %v320, 1
        %v1778 = vsel %vm410, %v1775, %v1777
        %v1779 = vrot.slane %v321, 1
        %v1780 = vsel %vm410, %v1777, %v1779
        %v1781 = vrot.slane %v322, 1
        %v1782 = vsel %vm410, %v1779, %v1781
        %v1783 = vrot.slane %v323, 1
        %v1784 = vsel %vm410, %v1781, %v1783
        %v1785 = vrot.slane %v324, 1
        %v1786 = vsel %vm410, %v1783, %v1785
        %v1787 = vrot.slane %v325, 1
        %v1788 = vsel %vm410, %v1785, %v1787
        %v1789 = vrot.slane %v326, 1
        %v1790 = vsel %vm410, %v1787, %v1789
        %v1791 = vrot.slane %v327, 1
        %v1792 = vsel %vm410, %v1789, %v1791
        %v1793 = vrot.slane %v328, 1
        %v1794 = vsel %vm410, %v1791, %v1793
        %v1795 = vrot.slane %v329, 1
        %v1796 = vsel %vm410, %v1793, %v1795
        %v1797 = vrot.slane %v330, 1
        %v1798 = vsel %vm410, %v1795, %v1797
        %v1799 = vrot.slane %v331, 1
        %v1800 = vsel %vm410, %v1797, %v1799
        %v1801 = vrot.slane %v332, 1
        %v1802 = vsel %vm410, %v1799, %v1801
        %v1803 = vrot.slane %v333, 1
        %v1804 = vsel %vm410, %v1801, %v1803
        %v1805 = vrot.slane %v334, 1
        %v1806 = vsel %vm410, %v1803, %v1805
        %v1807 = vrot.slane %v335, 1
        %v1808 = vsel %vm410, %v1805, %v1807
        %v1809 = vrot.slane %v336, 1
        %v1810 = vsel %vm410, %v1807, %v1809
        %v1811 = vrot.slane %v337, 1
        %v1812 = vsel %vm410, %v1809, %v1811
        %v1813 = vrot.slane %v338, 1
        %v1814 = vsel %vm410, %v1811, %v1813
        %v1815 = vrot.slane %v339, 1
        %v1816 = vsel %vm410, %v1813, %v1815
        %v1817 = vrot.slane %v340, 1
        %v1818 = vsel %vm410, %v1815, %v1817
        %v1819 = vrot.slane %v341, 1
        %v1820 = vsel %vm410, %v1817, %v1819
        %v1821 = vrot.slane %v342, 1
        %v1822 = vsel %vm410, %v1819, %v1821
        %v1823 = vrot.slane %v343, 1
        %v1824 = vsel %vm410, %v1821, %v1823
        %v1825 = vrot.slane %v344, 1
        %v1826 = vsel %vm410, %v1823, %v1825
        %v1827 = vrot.slane %v345, 1
        %v1828 = vsel %vm410, %v1825, %v1827
        %v1829 = vrot.slane %v346, 1
        %v1830 = vsel %vm410, %v1827, %v1829
        %v1831 = vrot.slane %v347, 1
        %v1832 = vsel %vm410, %v1829, %v1831
        %v1833 = vrot.slane %v348, 1
        %v1834 = vsel %vm410, %v1831, %v1833
        %v1835 = vrot.slane %v349, 1
        %v1836 = vsel %vm410, %v1833, %v1835
        %v1837 = vrot.slane %v350, 1
        %v1838 = vsel %vm410, %v1835, %v1837
        %v1839 = vrot.slane %v351, 1
        %v1840 = vsel %vm410, %v1837, %v1839
        %v1841 = vrot.slane %v352, 1
        %v1842 = vsel %vm410, %v1839, %v1841
        %v1843 = vrot.slane %v353, 1
        %v1844 = vsel %vm410, %v1841, %v1843
        %v1845 = vrot.slane %v354, 1
        %v1846 = vsel %vm410, %v1843, %v1845
        %v1847 = vrot.slane %v355, 1
        %v1848 = vsel %vm410, %v1845, %v1847
        %v1849 = vrot.slane %v356, 1
        %v1850 = vsel %vm410, %v1847, %v1849
        %v1851 = vrot.slane %v357, 1
        %v1852 = vsel %vm410, %v1849, %v1851
        %v1853 = vrot.slane %v358, 1
        %v1854 = vsel %vm410, %v1851, %v1853
        %v1855 = vrot.slane %v359, 1
        %v1856 = vsel %vm410, %v1853, %v1855
        %v1857 = vrot.slane %v360, 1
        %v1858 = vsel %vm410, %v1855, %v1857
        %1859 = vrot.lane.b32.xlu0 %v1764, 28
        %v1860 = vpop.permute.xlu0 %1859
        %1861 = vrot.lane.b32.xlu0 %v1766, 28
        %v1862 = vpop.permute.xlu0 %1861
        %1863 = vrot.lane.b32.xlu0 %v1768, 28
        %v1864 = vpop.permute.xlu0 %1863
        %1865 = vrot.lane.b32.xlu0 %v1770, 28
        %v1866 = vpop.permute.xlu0 %1865
        %1867 = vrot.lane.b32.xlu0 %v1772, 28
        %v1868 = vpop.permute.xlu0 %1867
        %1869 = vrot.lane.b32.xlu0 %v1774, 28
        %v1870 = vpop.permute.xlu0 %1869
        %1871 = vrot.lane.b32.xlu0 %v1776, 28
        %v1872 = vpop.permute.xlu0 %1871
        %1873 = vrot.lane.b32.xlu0 %v1778, 28
        %v1874 = vpop.permute.xlu0 %1873
        %1875 = vrot.lane.b32.xlu0 %v1780, 28
        %v1876 = vpop.permute.xlu0 %1875
        %1877 = vrot.lane.b32.xlu0 %v1782, 28
        %v1878 = vpop.permute.xlu0 %1877
        %1879 = vrot.lane.b32.xlu0 %v1784, 28
        %v1880 = vpop.permute.xlu0 %1879
        %1881 = vrot.lane.b32.xlu0 %v1786, 28
        %v1882 = vpop.permute.xlu0 %1881
        %1883 = vrot.lane.b32.xlu0 %v1788, 28
        %v1884 = vpop.permute.xlu0 %1883
        %1885 = vrot.lane.b32.xlu0 %v1790, 28
        %v1886 = vpop.permute.xlu0 %1885
        %1887 = vrot.lane.b32.xlu0 %v1792, 28
        %v1888 = vpop.permute.xlu0 %1887
        %1889 = vrot.lane.b32.xlu0 %v1794, 28
        %v1890 = vpop.permute.xlu0 %1889
        %1891 = vrot.lane.b32.xlu0 %v1796, 28
        %v1892 = vpop.permute.xlu0 %1891
        %1893 = vrot.lane.b32.xlu0 %v1798, 28
        %v1894 = vpop.permute.xlu0 %1893
        %1895 = vrot.lane.b32.xlu0 %v1800, 28
        %v1896 = vpop.permute.xlu0 %1895
        %1897 = vrot.lane.b32.xlu0 %v1802, 28
        %v1898 = vpop.permute.xlu0 %1897
        %1899 = vrot.lane.b32.xlu0 %v1804, 28
        %v1900 = vpop.permute.xlu0 %1899
        %1901 = vrot.lane.b32.xlu0 %v1806, 28
        %v1902 = vpop.permute.xlu0 %1901
        %1903 = vrot.lane.b32.xlu0 %v1808, 28
        %v1904 = vpop.permute.xlu0 %1903
        %1905 = vrot.lane.b32.xlu0 %v1810, 28
        %v1906 = vpop.permute.xlu0 %1905
        %1907 = vrot.lane.b32.xlu0 %v1812, 28
        %v1908 = vpop.permute.xlu0 %1907
        %1909 = vrot.lane.b32.xlu0 %v1814, 28
        %v1910 = vpop.permute.xlu0 %1909
        %1911 = vrot.lane.b32.xlu0 %v1816, 28
        %v1912 = vpop.permute.xlu0 %1911
        %1913 = vrot.lane.b32.xlu0 %v1818, 28
        %v1914 = vpop.permute.xlu0 %1913
        %1915 = vrot.lane.b32.xlu0 %v1820, 28
        %v1916 = vpop.permute.xlu0 %1915
        %1917 = vrot.lane.b32.xlu0 %v1822, 28
        %v1918 = vpop.permute.xlu0 %1917
        %1919 = vrot.lane.b32.xlu0 %v1824, 28
        %v1920 = vpop.permute.xlu0 %1919
        %1921 = vrot.lane.b32.xlu0 %v1826, 28
        %v1922 = vpop.permute.xlu0 %1921
        %1923 = vrot.lane.b32.xlu0 %v1828, 28
        %v1924 = vpop.permute.xlu0 %1923
        %1925 = vrot.lane.b32.xlu0 %v1830, 28
        %v1926 = vpop.permute.xlu0 %1925
        %1927 = vrot.lane.b32.xlu0 %v1832, 28
        %v1928 = vpop.permute.xlu0 %1927
        %1929 = vrot.lane.b32.xlu0 %v1834, 28
        %v1930 = vpop.permute.xlu0 %1929
        %1931 = vrot.lane.b32.xlu0 %v1836, 28
        %v1932 = vpop.permute.xlu0 %1931
        %1933 = vrot.lane.b32.xlu0 %v1838, 28
        %v1934 = vpop.permute.xlu0 %1933
        %1935 = vrot.lane.b32.xlu0 %v1840, 28
        %v1936 = vpop.permute.xlu0 %1935
        %1937 = vrot.lane.b32.xlu0 %v1842, 28
        %v1938 = vpop.permute.xlu0 %1937
        %1939 = vrot.lane.b32.xlu0 %v1844, 28
        %v1940 = vpop.permute.xlu0 %1939
        %1941 = vrot.lane.b32.xlu0 %v1846, 28
        %v1942 = vpop.permute.xlu0 %1941
        %1943 = vrot.lane.b32.xlu0 %v1848, 28
        %v1944 = vpop.permute.xlu0 %1943
        %1945 = vrot.lane.b32.xlu0 %v1850, 28
        %v1946 = vpop.permute.xlu0 %1945
        %1947 = vrot.lane.b32.xlu0 %v1852, 28
        %v1948 = vpop.permute.xlu0 %1947
        %1949 = vrot.lane.b32.xlu0 %v1854, 28
        %v1950 = vpop.permute.xlu0 %1949
        %1951 = vrot.lane.b32.xlu0 %v1856, 28
        %v1952 = vpop.permute.xlu0 %1951
        %1953 = vrot.lane.b32.xlu0 %v1858, 28
        %v1954 = vpop.permute.xlu0 %1953
        %v2003 = vrot.slane %v312, 2
        %v2004 = vrot.slane %v313, 2
        %v2005 = vsel %vm652, %v2003, %v2004
        %v2006 = vrot.slane %v314, 2
        %v2007 = vsel %vm652, %v2004, %v2006
        %v2008 = vrot.slane %v315, 2
        %v2009 = vsel %vm652, %v2006, %v2008
        %v2010 = vrot.slane %v316, 2
        %v2011 = vsel %vm652, %v2008, %v2010
        %v2012 = vrot.slane %v317, 2
        %v2013 = vsel %vm652, %v2010, %v2012
        %v2014 = vrot.slane %v318, 2
        %v2015 = vsel %vm652, %v2012, %v2014
        %v2016 = vrot.slane %v319, 2
        %v2017 = vsel %vm652, %v2014, %v2016
        %v2018 = vrot.slane %v320, 2
        %v2019 = vsel %vm652, %v2016, %v2018
        %v2020 = vrot.slane %v321, 2
        %v2021 = vsel %vm652, %v2018, %v2020
        %v2022 = vrot.slane %v322, 2
        %v2023 = vsel %vm652, %v2020, %v2022
        %v2024 = vrot.slane %v323, 2
        %v2025 = vsel %vm652, %v2022, %v2024
        %v2026 = vrot.slane %v324, 2
        %v2027 = vsel %vm652, %v2024, %v2026
        %v2028 = vrot.slane %v325, 2
        %v2029 = vsel %vm652, %v2026, %v2028
        %v2030 = vrot.slane %v326, 2
        %v2031 = vsel %vm652, %v2028, %v2030
        %v2032 = vrot.slane %v327, 2
        %v2033 = vsel %vm652, %v2030, %v2032
        %v2034 = vrot.slane %v328, 2
        %v2035 = vsel %vm652, %v2032, %v2034
        %v2036 = vrot.slane %v329, 2
        %v2037 = vsel %vm652, %v2034, %v2036
        %v2038 = vrot.slane %v330, 2
        %v2039 = vsel %vm652, %v2036, %v2038
        %v2040 = vrot.slane %v331, 2
        %v2041 = vsel %vm652, %v2038, %v2040
        %v2042 = vrot.slane %v332, 2
        %v2043 = vsel %vm652, %v2040, %v2042
        %v2044 = vrot.slane %v333, 2
        %v2045 = vsel %vm652, %v2042, %v2044
        %v2046 = vrot.slane %v334, 2
        %v2047 = vsel %vm652, %v2044, %v2046
        %v2048 = vrot.slane %v335, 2
        %v2049 = vsel %vm652, %v2046, %v2048
        %v2050 = vrot.slane %v336, 2
        %v2051 = vsel %vm652, %v2048, %v2050
        %v2052 = vrot.slane %v337, 2
        %v2053 = vsel %vm652, %v2050, %v2052
        %v2054 = vrot.slane %v338, 2
        %v2055 = vsel %vm652, %v2052, %v2054
        %v2056 = vrot.slane %v339, 2
        %v2057 = vsel %vm652, %v2054, %v2056
        %v2058 = vrot.slane %v340, 2
        %v2059 = vsel %vm652, %v2056, %v2058
        %v2060 = vrot.slane %v341, 2
        %v2061 = vsel %vm652, %v2058, %v2060
        %v2062 = vrot.slane %v342, 2
        %v2063 = vsel %vm652, %v2060, %v2062
        %v2064 = vrot.slane %v343, 2
        %v2065 = vsel %vm652, %v2062, %v2064
        %v2066 = vrot.slane %v344, 2
        %v2067 = vsel %vm652, %v2064, %v2066
        %v2068 = vrot.slane %v345, 2
        %v2069 = vsel %vm652, %v2066, %v2068
        %v2070 = vrot.slane %v346, 2
        %v2071 = vsel %vm652, %v2068, %v2070
        %v2072 = vrot.slane %v347, 2
        %v2073 = vsel %vm652, %v2070, %v2072
        %v2074 = vrot.slane %v348, 2
        %v2075 = vsel %vm652, %v2072, %v2074
        %v2076 = vrot.slane %v349, 2
        %v2077 = vsel %vm652, %v2074, %v2076
        %v2078 = vrot.slane %v350, 2
        %v2079 = vsel %vm652, %v2076, %v2078
        %v2080 = vrot.slane %v351, 2
        %v2081 = vsel %vm652, %v2078, %v2080
        %v2082 = vrot.slane %v352, 2
        %v2083 = vsel %vm652, %v2080, %v2082
        %v2084 = vrot.slane %v353, 2
        %v2085 = vsel %vm652, %v2082, %v2084
        %v2086 = vrot.slane %v354, 2
        %v2087 = vsel %vm652, %v2084, %v2086
        %v2088 = vrot.slane %v355, 2
        %v2089 = vsel %vm652, %v2086, %v2088
        %v2090 = vrot.slane %v356, 2
        %v2091 = vsel %vm652, %v2088, %v2090
        %v2092 = vrot.slane %v357, 2
        %v2093 = vsel %vm652, %v2090, %v2092
        %v2094 = vrot.slane %v358, 2
        %v2095 = vsel %vm652, %v2092, %v2094
        %v2096 = vrot.slane %v359, 2
        %v2097 = vsel %vm652, %v2094, %v2096
        %v2098 = vrot.slane %v360, 2
        %v2099 = vsel %vm652, %v2096, %v2098
        %2100 = vrot.lane.b32.xlu0 %v2005, 32
        %v2101 = vpop.permute.xlu0 %2100
        %2102 = vrot.lane.b32.xlu0 %v2007, 32
        %v2103 = vpop.permute.xlu0 %2102
        %2104 = vrot.lane.b32.xlu0 %v2009, 32
        %v2105 = vpop.permute.xlu0 %2104
        %2106 = vrot.lane.b32.xlu0 %v2011, 32
        %v2107 = vpop.permute.xlu0 %2106
        %2108 = vrot.lane.b32.xlu0 %v2013, 32
        %v2109 = vpop.permute.xlu0 %2108
        %2110 = vrot.lane.b32.xlu0 %v2015, 32
        %v2111 = vpop.permute.xlu0 %2110
        %2112 = vrot.lane.b32.xlu0 %v2017, 32
        %v2113 = vpop.permute.xlu0 %2112
        %2114 = vrot.lane.b32.xlu0 %v2019, 32
        %v2115 = vpop.permute.xlu0 %2114
        %2116 = vrot.lane.b32.xlu0 %v2021, 32
        %v2117 = vpop.permute.xlu0 %2116
        %2118 = vrot.lane.b32.xlu0 %v2023, 32
        %v2119 = vpop.permute.xlu0 %2118
        %2120 = vrot.lane.b32.xlu0 %v2025, 32
        %v2121 = vpop.permute.xlu0 %2120
        %2122 = vrot.lane.b32.xlu0 %v2027, 32
        %v2123 = vpop.permute.xlu0 %2122
        %2124 = vrot.lane.b32.xlu0 %v2029, 32
        %v2125 = vpop.permute.xlu0 %2124
        %2126 = vrot.lane.b32.xlu0 %v2031, 32
        %v2127 = vpop.permute.xlu0 %2126
        %2128 = vrot.lane.b32.xlu0 %v2033, 32
        %v2129 = vpop.permute.xlu0 %2128
        %2130 = vrot.lane.b32.xlu0 %v2035, 32
        %v2131 = vpop.permute.xlu0 %2130
        %2132 = vrot.lane.b32.xlu0 %v2037, 32
        %v2133 = vpop.permute.xlu0 %2132
        %2134 = vrot.lane.b32.xlu0 %v2039, 32
        %v2135 = vpop.permute.xlu0 %2134
        %2136 = vrot.lane.b32.xlu0 %v2041, 32
        %v2137 = vpop.permute.xlu0 %2136
        %2138 = vrot.lane.b32.xlu0 %v2043, 32
        %v2139 = vpop.permute.xlu0 %2138
        %2140 = vrot.lane.b32.xlu0 %v2045, 32
        %v2141 = vpop.permute.xlu0 %2140
        %2142 = vrot.lane.b32.xlu0 %v2047, 32
        %v2143 = vpop.permute.xlu0 %2142
        %2144 = vrot.lane.b32.xlu0 %v2049, 32
        %v2145 = vpop.permute.xlu0 %2144
        %2146 = vrot.lane.b32.xlu0 %v2051, 32
        %v2147 = vpop.permute.xlu0 %2146
        %2148 = vrot.lane.b32.xlu0 %v2053, 32
        %v2149 = vpop.permute.xlu0 %2148
        %2150 = vrot.lane.b32.xlu0 %v2055, 32
        %v2151 = vpop.permute.xlu0 %2150
        %2152 = vrot.lane.b32.xlu0 %v2057, 32
        %v2153 = vpop.permute.xlu0 %2152
        %2154 = vrot.lane.b32.xlu0 %v2059, 32
        %v2155 = vpop.permute.xlu0 %2154
        %2156 = vrot.lane.b32.xlu0 %v2061, 32
        %v2157 = vpop.permute.xlu0 %2156
        %2158 = vrot.lane.b32.xlu0 %v2063, 32
        %v2159 = vpop.permute.xlu0 %2158
        %2160 = vrot.lane.b32.xlu0 %v2065, 32
        %v2161 = vpop.permute.xlu0 %2160
        %2162 = vrot.lane.b32.xlu0 %v2067, 32
        %v2163 = vpop.permute.xlu0 %2162
        %2164 = vrot.lane.b32.xlu0 %v2069, 32
        %v2165 = vpop.permute.xlu0 %2164
        %2166 = vrot.lane.b32.xlu0 %v2071, 32
        %v2167 = vpop.permute.xlu0 %2166
        %2168 = vrot.lane.b32.xlu0 %v2073, 32
        %v2169 = vpop.permute.xlu0 %2168
        %2170 = vrot.lane.b32.xlu0 %v2075, 32
        %v2171 = vpop.permute.xlu0 %2170
        %2172 = vrot.lane.b32.xlu0 %v2077, 32
        %v2173 = vpop.permute.xlu0 %2172
        %2174 = vrot.lane.b32.xlu0 %v2079, 32
        %v2175 = vpop.permute.xlu0 %2174
        %2176 = vrot.lane.b32.xlu0 %v2081, 32
        %v2177 = vpop.permute.xlu0 %2176
        %2178 = vrot.lane.b32.xlu0 %v2083, 32
        %v2179 = vpop.permute.xlu0 %2178
        %2180 = vrot.lane.b32.xlu0 %v2085, 32
        %v2181 = vpop.permute.xlu0 %2180
        %2182 = vrot.lane.b32.xlu0 %v2087, 32
        %v2183 = vpop.permute.xlu0 %2182
        %2184 = vrot.lane.b32.xlu0 %v2089, 32
        %v2185 = vpop.permute.xlu0 %2184
        %2186 = vrot.lane.b32.xlu0 %v2091, 32
        %v2187 = vpop.permute.xlu0 %2186
        %2188 = vrot.lane.b32.xlu0 %v2093, 32
        %v2189 = vpop.permute.xlu0 %2188
        %2190 = vrot.lane.b32.xlu0 %v2095, 32
        %v2191 = vpop.permute.xlu0 %2190
        %2192 = vrot.lane.b32.xlu0 %v2097, 32
        %v2193 = vpop.permute.xlu0 %2192
        %2194 = vrot.lane.b32.xlu0 %v2099, 32
        %v2195 = vpop.permute.xlu0 %2194
        %vm2244 = vcmask 31744
        %v2245 = vsel %vm2244, %v212, %v509
        %v2246 = vsel %vm2244, %v213, %v511
        %v2247 = vsel %vm2244, %v214, %v513
        %v2248 = vsel %vm2244, %v215, %v515
        %v2249 = vsel %vm2244, %v216, %v517
        %v2250 = vsel %vm2244, %v217, %v519
        %v2251 = vsel %vm2244, %v218, %v521
        %v2252 = vsel %vm2244, %v219, %v523
        %v2253 = vsel %vm2244, %v220, %v525
        %v2254 = vsel %vm2244, %v221, %v527
        %v2255 = vsel %vm2244, %v222, %v529
        %v2256 = vsel %vm2244, %v223, %v531
        %v2257 = vsel %vm2244, %v224, %v533
        %v2258 = vsel %vm2244, %v225, %v535
        %v2259 = vsel %vm2244, %v226, %v537
        %v2260 = vsel %vm2244, %v227, %v539
        %v2261 = vsel %vm2244, %v228, %v541
        %v2262 = vsel %vm2244, %v229, %v543
        %v2263 = vsel %vm2244, %v230, %v545
        %v2264 = vsel %vm2244, %v231, %v547
        %v2265 = vsel %vm2244, %v232, %v549
        %v2266 = vsel %vm2244, %v233, %v551
        %v2267 = vsel %vm2244, %v234, %v553
        %v2268 = vsel %vm2244, %v235, %v555
        %v2269 = vsel %vm2244, %v236, %v557
        %v2270 = vsel %vm2244, %v237, %v559
        %v2271 = vsel %vm2244, %v238, %v561
        %v2272 = vsel %vm2244, %v239, %v563
        %v2273 = vsel %vm2244, %v240, %v565
        %v2274 = vsel %vm2244, %v241, %v567
        %v2275 = vsel %vm2244, %v242, %v569
        %v2276 = vsel %vm2244, %v243, %v571
        %v2277 = vsel %vm2244, %v244, %v573
        %v2278 = vsel %vm2244, %v245, %v575
        %v2279 = vsel %vm2244, %v246, %v577
        %v2280 = vsel %vm2244, %v247, %v579
        %v2281 = vsel %vm2244, %v248, %v581
        %v2282 = vsel %vm2244, %v249, %v583
        %v2283 = vsel %vm2244, %v250, %v585
        %v2284 = vsel %vm2244, %v251, %v587
        %v2285 = vsel %vm2244, %v252, %v589
        %v2286 = vsel %vm2244, %v253, %v591
        %v2287 = vsel %vm2244, %v254, %v593
        %v2288 = vsel %vm2244, %v255, %v595
        %v2289 = vsel %vm2244, %v256, %v597
        %v2290 = vsel %vm2244, %v257, %v599
        %v2291 = vsel %vm2244, %v258, %v601
        %v2292 = vsel %vm2244, %v259, %v603
        %vm2293 = vcmask 64512
        %v2294 = vsel %vm2293, %v2245, %v751
        %v2295 = vsel %vm2293, %v2246, %v753
        %v2296 = vsel %vm2293, %v2247, %v755
        %v2297 = vsel %vm2293, %v2248, %v757
        %v2298 = vsel %vm2293, %v2249, %v759
        %v2299 = vsel %vm2293, %v2250, %v761
        %v2300 = vsel %vm2293, %v2251, %v763
        %v2301 = vsel %vm2293, %v2252, %v765
        %v2302 = vsel %vm2293, %v2253, %v767
        %v2303 = vsel %vm2293, %v2254, %v769
        %v2304 = vsel %vm2293, %v2255, %v771
        %v2305 = vsel %vm2293, %v2256, %v773
        %v2306 = vsel %vm2293, %v2257, %v775
        %v2307 = vsel %vm2293, %v2258, %v777
        %v2308 = vsel %vm2293, %v2259, %v779
        %v2309 = vsel %vm2293, %v2260, %v781
        %v2310 = vsel %vm2293, %v2261, %v783
        %v2311 = vsel %vm2293, %v2262, %v785
        %v2312 = vsel %vm2293, %v2263, %v787
        %v2313 = vsel %vm2293, %v2264, %v789
        %v2314 = vsel %vm2293, %v2265, %v791
        %v2315 = vsel %vm2293, %v2266, %v793
        %v2316 = vsel %vm2293, %v2267, %v795
        %v2317 = vsel %vm2293, %v2268, %v797
        %v2318 = vsel %vm2293, %v2269, %v799
        %v2319 = vsel %vm2293, %v2270, %v801
        %v2320 = vsel %vm2293, %v2271, %v803
        %v2321 = vsel %vm2293, %v2272, %v805
        %v2322 = vsel %vm2293, %v2273, %v807
        %v2323 = vsel %vm2293, %v2274, %v809
        %v2324 = vsel %vm2293, %v2275, %v811
        %v2325 = vsel %vm2293, %v2276, %v813
        %v2326 = vsel %vm2293, %v2277, %v815
        %v2327 = vsel %vm2293, %v2278, %v817
        %v2328 = vsel %vm2293, %v2279, %v819
        %v2329 = vsel %vm2293, %v2280, %v821
        %v2330 = vsel %vm2293, %v2281, %v823
        %v2331 = vsel %vm2293, %v2282, %v825
        %v2332 = vsel %vm2293, %v2283, %v827
        %v2333 = vsel %vm2293, %v2284, %v829
        %v2334 = vsel %vm2293, %v2285, %v831
        %v2335 = vsel %vm2293, %v2286, %v833
        %v2336 = vsel %vm2293, %v2287, %v835
        %v2337 = vsel %vm2293, %v2288, %v837
        %v2338 = vsel %vm2293, %v2289, %v839
        %v2339 = vsel %vm2293, %v2290, %v841
        %v2340 = vsel %vm2293, %v2291, %v843
        %v2341 = vsel %vm2293, %v2292, %v845
        %vm2342 = vcmask 97280
        %v2343 = vsel %vm2342, %v2294, %v943
        %v2344 = vsel %vm2342, %v2295, %v945
        %v2345 = vsel %vm2342, %v2296, %v947
        %v2346 = vsel %vm2342, %v2297, %v949
        %v2347 = vsel %vm2342, %v2298, %v951
        %v2348 = vsel %vm2342, %v2299, %v953
        %v2349 = vsel %vm2342, %v2300, %v955
        %v2350 = vsel %vm2342, %v2301, %v957
        %v2351 = vsel %vm2342, %v2302, %v959
        %v2352 = vsel %vm2342, %v2303, %v961
        %v2353 = vsel %vm2342, %v2304, %v963
        %v2354 = vsel %vm2342, %v2305, %v965
        %v2355 = vsel %vm2342, %v2306, %v967
        %v2356 = vsel %vm2342, %v2307, %v969
        %v2357 = vsel %vm2342, %v2308, %v971
        %v2358 = vsel %vm2342, %v2309, %v973
        %v2359 = vsel %vm2342, %v2310, %v975
        %v2360 = vsel %vm2342, %v2311, %v977
        %v2361 = vsel %vm2342, %v2312, %v979
        %v2362 = vsel %vm2342, %v2313, %v981
        %v2363 = vsel %vm2342, %v2314, %v983
        %v2364 = vsel %vm2342, %v2315, %v985
        %v2365 = vsel %vm2342, %v2316, %v987
        %v2366 = vsel %vm2342, %v2317, %v989
        %v2367 = vsel %vm2342, %v2318, %v991
        %v2368 = vsel %vm2342, %v2319, %v993
        %v2369 = vsel %vm2342, %v2320, %v995
        %v2370 = vsel %vm2342, %v2321, %v997
        %v2371 = vsel %vm2342, %v2322, %v999
        %v2372 = vsel %vm2342, %v2323, %v1001
        %v2373 = vsel %vm2342, %v2324, %v1003
        %v2374 = vsel %vm2342, %v2325, %v1005
        %v2375 = vsel %vm2342, %v2326, %v1007
        %v2376 = vsel %vm2342, %v2327, %v1009
        %v2377 = vsel %vm2342, %v2328, %v1011
        %v2378 = vsel %vm2342, %v2329, %v1013
        %v2379 = vsel %vm2342, %v2330, %v1015
        %v2380 = vsel %vm2342, %v2331, %v1017
        %v2381 = vsel %vm2342, %v2332, %v1019
        %v2382 = vsel %vm2342, %v2333, %v1021
        %v2383 = vsel %vm2342, %v2334, %v1023
        %v2384 = vsel %vm2342, %v2335, %v1025
        %v2385 = vsel %vm2342, %v2336, %v1027
        %v2386 = vsel %vm2342, %v2337, %v1029
        %v2387 = vsel %vm2342, %v2338, %v1031
        %v2388 = vsel %vm2342, %v2339, %v1033
        %v2389 = vsel %vm2342, %v2340, %v1035
        %v2390 = vsel %vm2342, %v2341, %v1037
        %vm2391 = vcmask 130048
        %v2392 = vsel %vm2391, %v2343, %v1185
        %v2393 = vsel %vm2391, %v2344, %v1187
        %v2394 = vsel %vm2391, %v2345, %v1189
        %v2395 = vsel %vm2391, %v2346, %v1191
        %v2396 = vsel %vm2391, %v2347, %v1193
        %v2397 = vsel %vm2391, %v2348, %v1195
        %v2398 = vsel %vm2391, %v2349, %v1197
        %v2399 = vsel %vm2391, %v2350, %v1199
        %v2400 = vsel %vm2391, %v2351, %v1201
        %v2401 = vsel %vm2391, %v2352, %v1203
        %v2402 = vsel %vm2391, %v2353, %v1205
        %v2403 = vsel %vm2391, %v2354, %v1207
        %v2404 = vsel %vm2391, %v2355, %v1209
        %v2405 = vsel %vm2391, %v2356, %v1211
        %v2406 = vsel %vm2391, %v2357, %v1213
        %v2407 = vsel %vm2391, %v2358, %v1215
        %v2408 = vsel %vm2391, %v2359, %v1217
        %v2409 = vsel %vm2391, %v2360, %v1219
        %v2410 = vsel %vm2391, %v2361, %v1221
        %v2411 = vsel %vm2391, %v2362, %v1223
        %v2412 = vsel %vm2391, %v2363, %v1225
        %v2413 = vsel %vm2391, %v2364, %v1227
        %v2414 = vsel %vm2391, %v2365, %v1229
        %v2415 = vsel %vm2391, %v2366, %v1231
        %v2416 = vsel %vm2391, %v2367, %v1233
        %v2417 = vsel %vm2391, %v2368, %v1235
        %v2418 = vsel %vm2391, %v2369, %v1237
        %v2419 = vsel %vm2391, %v2370, %v1239
        %v2420 = vsel %vm2391, %v2371, %v1241
        %v2421 = vsel %vm2391, %v2372, %v1243
        %v2422 = vsel %vm2391, %v2373, %v1245
        %v2423 = vsel %vm2391, %v2374, %v1247
        %v2424 = vsel %vm2391, %v2375, %v1249
        %v2425 = vsel %vm2391, %v2376, %v1251
        %v2426 = vsel %vm2391, %v2377, %v1253
        %v2427 = vsel %vm2391, %v2378, %v1255
        %v2428 = vsel %vm2391, %v2379, %v1257
        %v2429 = vsel %vm2391, %v2380, %v1259
        %v2430 = vsel %vm2391, %v2381, %v1261
        %v2431 = vsel %vm2391, %v2382, %v1263
        %v2432 = vsel %vm2391, %v2383, %v1265
        %v2433 = vsel %vm2391, %v2384, %v1267
        %v2434 = vsel %vm2391, %v2385, %v1269
        %v2435 = vsel %vm2391, %v2386, %v1271
        %v2436 = vsel %vm2391, %v2387, %v1273
        %v2437 = vsel %vm2391, %v2388, %v1275
        %v2438 = vsel %vm2391, %v2389, %v1277
        %v2439 = vsel %vm2391, %v2390, %v1279
        %vm2440 = vcmask 162816
        %v2441 = vsel %vm2440, %v2392, %v1426
        %v2442 = vsel %vm2440, %v2393, %v1428
        %v2443 = vsel %vm2440, %v2394, %v1430
        %v2444 = vsel %vm2440, %v2395, %v1432
        %v2445 = vsel %vm2440, %v2396, %v1434
        %v2446 = vsel %vm2440, %v2397, %v1436
        %v2447 = vsel %vm2440, %v2398, %v1438
        %v2448 = vsel %vm2440, %v2399, %v1440
        %v2449 = vsel %vm2440, %v2400, %v1442
        %v2450 = vsel %vm2440, %v2401, %v1444
        %v2451 = vsel %vm2440, %v2402, %v1446
        %v2452 = vsel %vm2440, %v2403, %v1448
        %v2453 = vsel %vm2440, %v2404, %v1450
        %v2454 = vsel %vm2440, %v2405, %v1452
        %v2455 = vsel %vm2440, %v2406, %v1454
        %v2456 = vsel %vm2440, %v2407, %v1456
        %v2457 = vsel %vm2440, %v2408, %v1458
        %v2458 = vsel %vm2440, %v2409, %v1460
        %v2459 = vsel %vm2440, %v2410, %v1462
        %v2460 = vsel %vm2440, %v2411, %v1464
        %v2461 = vsel %vm2440, %v2412, %v1466
        %v2462 = vsel %vm2440, %v2413, %v1468
        %v2463 = vsel %vm2440, %v2414, %v1470
        %v2464 = vsel %vm2440, %v2415, %v1472
        %v2465 = vsel %vm2440, %v2416, %v1474
        %v2466 = vsel %vm2440, %v2417, %v1476
        %v2467 = vsel %vm2440, %v2418, %v1478
        %v2468 = vsel %vm2440, %v2419, %v1480
        %v2469 = vsel %vm2440, %v2420, %v1482
        %v2470 = vsel %vm2440, %v2421, %v1484
        %v2471 = vsel %vm2440, %v2422, %v1486
        %v2472 = vsel %vm2440, %v2423, %v1488
        %v2473 = vsel %vm2440, %v2424, %v1490
        %v2474 = vsel %vm2440, %v2425, %v1492
        %v2475 = vsel %vm2440, %v2426, %v1494
        %v2476 = vsel %vm2440, %v2427, %v1496
        %v2477 = vsel %vm2440, %v2428, %v1498
        %v2478 = vsel %vm2440, %v2429, %v1500
        %v2479 = vsel %vm2440, %v2430, %v1502
        %v2480 = vsel %vm2440, %v2431, %v1504
        %v2481 = vsel %vm2440, %v2432, %v1506
        %v2482 = vsel %vm2440, %v2433, %v1508
        %v2483 = vsel %vm2440, %v2434, %v1510
        %v2484 = vsel %vm2440, %v2435, %v1512
        %v2485 = vsel %vm2440, %v2436, %v1514
        %v2486 = vsel %vm2440, %v2437, %v1516
        %v2487 = vsel %vm2440, %v2438, %v1518
        %v2488 = vsel %vm2440, %v2439, %v1520
        %vm2489 = vcmask 195584
        %v2490 = vsel %vm2489, %v2441, %v1618
        %v2491 = vsel %vm2489, %v2442, %v1620
        %v2492 = vsel %vm2489, %v2443, %v1622
        %v2493 = vsel %vm2489, %v2444, %v1624
        %v2494 = vsel %vm2489, %v2445, %v1626
        %v2495 = vsel %vm2489, %v2446, %v1628
        %v2496 = vsel %vm2489, %v2447, %v1630
        %v2497 = vsel %vm2489, %v2448, %v1632
        %v2498 = vsel %vm2489, %v2449, %v1634
        %v2499 = vsel %vm2489, %v2450, %v1636
        %v2500 = vsel %vm2489, %v2451, %v1638
        %v2501 = vsel %vm2489, %v2452, %v1640
        %v2502 = vsel %vm2489, %v2453, %v1642
        %v2503 = vsel %vm2489, %v2454, %v1644
        %v2504 = vsel %vm2489, %v2455, %v1646
        %v2505 = vsel %vm2489, %v2456, %v1648
        %v2506 = vsel %vm2489, %v2457, %v1650
        %v2507 = vsel %vm2489, %v2458, %v1652
        %v2508 = vsel %vm2489, %v2459, %v1654
        %v2509 = vsel %vm2489, %v2460, %v1656
        %v2510 = vsel %vm2489, %v2461, %v1658
        %v2511 = vsel %vm2489, %v2462, %v1660
        %v2512 = vsel %vm2489, %v2463, %v1662
        %v2513 = vsel %vm2489, %v2464, %v1664
        %v2514 = vsel %vm2489, %v2465, %v1666
        %v2515 = vsel %vm2489, %v2466, %v1668
        %v2516 = vsel %vm2489, %v2467, %v1670
        %v2517 = vsel %vm2489, %v2468, %v1672
        %v2518 = vsel %vm2489, %v2469, %v1674
        %v2519 = vsel %vm2489, %v2470, %v1676
        %v2520 = vsel %vm2489, %v2471, %v1678
        %v2521 = vsel %vm2489, %v2472, %v1680
        %v2522 = vsel %vm2489, %v2473, %v1682
        %v2523 = vsel %vm2489, %v2474, %v1684
        %v2524 = vsel %vm2489, %v2475, %v1686
        %v2525 = vsel %vm2489, %v2476, %v1688
        %v2526 = vsel %vm2489, %v2477, %v1690
        %v2527 = vsel %vm2489, %v2478, %v1692
        %v2528 = vsel %vm2489, %v2479, %v1694
        %v2529 = vsel %vm2489, %v2480, %v1696
        %v2530 = vsel %vm2489, %v2481, %v1698
        %v2531 = vsel %vm2489, %v2482, %v1700
        %v2532 = vsel %vm2489, %v2483, %v1702
        %v2533 = vsel %vm2489, %v2484, %v1704
        %v2534 = vsel %vm2489, %v2485, %v1706
        %v2535 = vsel %vm2489, %v2486, %v1708
        %v2536 = vsel %vm2489, %v2487, %v1710
        %v2537 = vsel %vm2489, %v2488, %v1712
        %vm2538 = vcmask 228352
        %v2539 = vsel %vm2538, %v2490, %v1860
        %v2540 = vsel %vm2538, %v2491, %v1862
        %v2541 = vsel %vm2538, %v2492, %v1864
        %v2542 = vsel %vm2538, %v2493, %v1866
        %v2543 = vsel %vm2538, %v2494, %v1868
        %v2544 = vsel %vm2538, %v2495, %v1870
        %v2545 = vsel %vm2538, %v2496, %v1872
        %v2546 = vsel %vm2538, %v2497, %v1874
        %v2547 = vsel %vm2538, %v2498, %v1876
        %v2548 = vsel %vm2538, %v2499, %v1878
        %v2549 = vsel %vm2538, %v2500, %v1880
        %v2550 = vsel %vm2538, %v2501, %v1882
        %v2551 = vsel %vm2538, %v2502, %v1884
        %v2552 = vsel %vm2538, %v2503, %v1886
        %v2553 = vsel %vm2538, %v2504, %v1888
        %v2554 = vsel %vm2538, %v2505, %v1890
        %v2555 = vsel %vm2538, %v2506, %v1892
        %v2556 = vsel %vm2538, %v2507, %v1894
        %v2557 = vsel %vm2538, %v2508, %v1896
        %v2558 = vsel %vm2538, %v2509, %v1898
        %v2559 = vsel %vm2538, %v2510, %v1900
        %v2560 = vsel %vm2538, %v2511, %v1902
        %v2561 = vsel %vm2538, %v2512, %v1904
        %v2562 = vsel %vm2538, %v2513, %v1906
        %v2563 = vsel %vm2538, %v2514, %v1908
        %v2564 = vsel %vm2538, %v2515, %v1910
        %v2565 = vsel %vm2538, %v2516, %v1912
        %v2566 = vsel %vm2538, %v2517, %v1914
        %v2567 = vsel %vm2538, %v2518, %v1916
        %v2568 = vsel %vm2538, %v2519, %v1918
        %v2569 = vsel %vm2538, %v2520, %v1920
        %v2570 = vsel %vm2538, %v2521, %v1922
        %v2571 = vsel %vm2538, %v2522, %v1924
        %v2572 = vsel %vm2538, %v2523, %v1926
        %v2573 = vsel %vm2538, %v2524, %v1928
        %v2574 = vsel %vm2538, %v2525, %v1930
        %v2575 = vsel %vm2538, %v2526, %v1932
        %v2576 = vsel %vm2538, %v2527, %v1934
        %v2577 = vsel %vm2538, %v2528, %v1936
        %v2578 = vsel %vm2538, %v2529, %v1938
        %v2579 = vsel %vm2538, %v2530, %v1940
        %v2580 = vsel %vm2538, %v2531, %v1942
        %v2581 = vsel %vm2538, %v2532, %v1944
        %v2582 = vsel %vm2538, %v2533, %v1946
        %v2583 = vsel %vm2538, %v2534, %v1948
        %v2584 = vsel %vm2538, %v2535, %v1950
        %v2585 = vsel %vm2538, %v2536, %v1952
        %v2586 = vsel %vm2538, %v2537, %v1954
        %vm2587 = vcmask 261120
        %v2588 = vsel %vm2587, %v2539, %v2101
        %v2589 = vsel %vm2587, %v2540, %v2103
        %v2590 = vsel %vm2587, %v2541, %v2105
        %v2591 = vsel %vm2587, %v2542, %v2107
        %v2592 = vsel %vm2587, %v2543, %v2109
        %v2593 = vsel %vm2587, %v2544, %v2111
        %v2594 = vsel %vm2587, %v2545, %v2113
        %v2595 = vsel %vm2587, %v2546, %v2115
        %v2596 = vsel %vm2587, %v2547, %v2117
        %v2597 = vsel %vm2587, %v2548, %v2119
        %v2598 = vsel %vm2587, %v2549, %v2121
        %v2599 = vsel %vm2587, %v2550, %v2123
        %v2600 = vsel %vm2587, %v2551, %v2125
        %v2601 = vsel %vm2587, %v2552, %v2127
        %v2602 = vsel %vm2587, %v2553, %v2129
        %v2603 = vsel %vm2587, %v2554, %v2131
        %v2604 = vsel %vm2587, %v2555, %v2133
        %v2605 = vsel %vm2587, %v2556, %v2135
        %v2606 = vsel %vm2587, %v2557, %v2137
        %v2607 = vsel %vm2587, %v2558, %v2139
        %v2608 = vsel %vm2587, %v2559, %v2141
        %v2609 = vsel %vm2587, %v2560, %v2143
        %v2610 = vsel %vm2587, %v2561, %v2145
        %v2611 = vsel %vm2587, %v2562, %v2147
        %v2612 = vsel %vm2587, %v2563, %v2149
        %v2613 = vsel %vm2587, %v2564, %v2151
        %v2614 = vsel %vm2587, %v2565, %v2153
        %v2615 = vsel %vm2587, %v2566, %v2155
        %v2616 = vsel %vm2587, %v2567, %v2157
        %v2617 = vsel %vm2587, %v2568, %v2159
        %v2618 = vsel %vm2587, %v2569, %v2161
        %v2619 = vsel %vm2587, %v2570, %v2163
        %v2620 = vsel %vm2587, %v2571, %v2165
        %v2621 = vsel %vm2587, %v2572, %v2167
        %v2622 = vsel %vm2587, %v2573, %v2169
        %v2623 = vsel %vm2587, %v2574, %v2171
        %v2624 = vsel %vm2587, %v2575, %v2173
        %v2625 = vsel %vm2587, %v2576, %v2175
        %v2626 = vsel %vm2587, %v2577, %v2177
        %v2627 = vsel %vm2587, %v2578, %v2179
        %v2628 = vsel %vm2587, %v2579, %v2181
        %v2629 = vsel %vm2587, %v2580, %v2183
        %v2630 = vsel %vm2587, %v2581, %v2185
        %v2631 = vsel %vm2587, %v2582, %v2187
        %v2632 = vsel %vm2587, %v2583, %v2189
        %v2633 = vsel %vm2587, %v2584, %v2191
        %v2634 = vsel %vm2587, %v2585, %v2193
        %v2635 = vsel %vm2587, %v2586, %v2195
        %v2636 = vld [vmem:[%s1] sm:$0xff]
        %v2637 = vld [vmem:[%s1 + $0x8] sm:$0xff]
        %v2638 = vld [vmem:[%s1 + $0x10] sm:$0xff]
        %v2639 = vld [vmem:[%s1 + $0x18] sm:$0xff]
        %v2640 = vld [vmem:[%s1 + $0x20] sm:$0xf]
        %vm2641 = vcmask 293888
        %v2643 = vsel %vm2641, %v2588, 0
        %v2646 = vsel %vm2641, %v2589, 0
        %v2649 = vsel %vm2641, %v2590, 0
        %v2652 = vsel %vm2641, %v2591, 0
        %v2655 = vsel %vm2641, %v2592, 0
        %v2658 = vsel %vm2641, %v2593, 0
        %v2661 = vsel %vm2641, %v2594, 0
        %v2664 = vsel %vm2641, %v2595, 0
        %v2667 = vsel %vm2641, %v2596, 0
        %v2670 = vsel %vm2641, %v2597, 0
        %v2673 = vsel %vm2641, %v2598, 0
        %v2676 = vsel %vm2641, %v2599, 0
        %v2679 = vsel %vm2641, %v2600, 0
        %v2682 = vsel %vm2641, %v2601, 0
        %v2685 = vsel %vm2641, %v2602, 0
        %v2688 = vsel %vm2641, %v2603, 0
        %v2691 = vsel %vm2641, %v2604, 0
        %v2694 = vsel %vm2641, %v2605, 0
        %v2697 = vsel %vm2641, %v2606, 0
        %v2700 = vsel %vm2641, %v2607, 0
        %v2703 = vsel %vm2641, %v2608, 0
        %v2706 = vsel %vm2641, %v2609, 0
        %v2709 = vsel %vm2641, %v2610, 0
        %v2712 = vsel %vm2641, %v2611, 0
        %v2715 = vsel %vm2641, %v2612, 0
        %v2718 = vsel %vm2641, %v2613, 0
        %v2721 = vsel %vm2641, %v2614, 0
        %v2724 = vsel %vm2641, %v2615, 0
        %v2727 = vsel %vm2641, %v2616, 0
        %v2730 = vsel %vm2641, %v2617, 0
        %v2733 = vsel %vm2641, %v2618, 0
        %v2736 = vsel %vm2641, %v2619, 0
        %v2739 = vsel %vm2641, %v2620, 0
        %v2742 = vsel %vm2641, %v2621, 0
        %v2745 = vsel %vm2641, %v2622, 0
        %v2748 = vsel %vm2641, %v2623, 0
        %v2751 = vsel %vm2641, %v2624, 0
        %v2754 = vsel %vm2641, %v2625, 0
        %v2757 = vsel %vm2641, %v2626, 0
        %v2760 = vsel %vm2641, %v2627, 0
        %v2763 = vsel %vm2641, %v2628, 0
        %v2766 = vsel %vm2641, %v2629, 0
        %v2769 = vsel %vm2641, %v2630, 0
        %v2772 = vsel %vm2641, %v2631, 0
        %v2775 = vsel %vm2641, %v2632, 0
        %v2778 = vsel %vm2641, %v2633, 0
        %v2781 = vsel %vm2641, %v2634, 0
        %v2784 = vsel %vm2641, %v2635, 0
        %vm2786 = vcmask 1043456
        %v2788 = vsel %vm2786, %v2640, 0
        %2790 = vmatpush.msra.mxu0 0.0
        %2791 = vmatpush.msra.mxu0 0.0
        %2792 = vmatpush.msra.mxu0 0.0
        %2793 = vmatpush.msra.mxu0 0.0
        %2794 = vmatpush.msra.mxu0 0.0
        %2795 = vmatpush.msra.mxu0 0.0
        %2796 = vmatpush.msra.mxu0 0.0
        %2797 = vmatpush.msra.mxu0 0.0
        %2798 = vmatpush.msra.mxu0 0.0
        %2799 = vmatpush.msra.mxu0 0.0
        %2800 = vmatpush.msra.mxu0 0.0
        %2801 = vmatpush.msra.mxu0 %v2788
        %2802 = vmatpush.msra.mxu0 %v2639
        %2803 = vmatpush.msra.mxu0 %v2638
        %2804 = vmatpush.msra.mxu0 %v2637
        %2805 = vmatpush.msra.mxu0 %v2636
        %2806 = vmatmul.f32.gmra.mxu0 %v2643
        %v2807 = vpop.f32.mrf.mxu0
        %v2808 = vadd.f32 0.0, %v2807
        %2809 = vmatmul.f32.gmra.mxu0 %v2646
        %v2810 = vpop.f32.mrf.mxu0
        %v2811 = vadd.f32 0.0, %v2810
        %2812 = vmatmul.f32.gmra.mxu0 %v2649
        %v2813 = vpop.f32.mrf.mxu0
        %v2814 = vadd.f32 0.0, %v2813
        %2815 = vmatmul.f32.gmra.mxu0 %v2652
        %v2816 = vpop.f32.mrf.mxu0
        %v2817 = vadd.f32 0.0, %v2816
        %2818 = vmatmul.f32.gmra.mxu0 %v2655
        %v2819 = vpop.f32.mrf.mxu0
        %v2820 = vadd.f32 0.0, %v2819
        %2821 = vmatmul.f32.gmra.mxu0 %v2658
        %v2822 = vpop.f32.mrf.mxu0
        %v2823 = vadd.f32 0.0, %v2822
        %2824 = vmatmul.f32.gmra.mxu0 %v2661
        %v2825 = vpop.f32.mrf.mxu0
        %v2826 = vadd.f32 0.0, %v2825
        %2827 = vmatmul.f32.gmra.mxu0 %v2664
        %v2828 = vpop.f32.mrf.mxu0
        %v2829 = vadd.f32 0.0, %v2828
        %2830 = vmatmul.f32.gmra.mxu0 %v2667
        %v2831 = vpop.f32.mrf.mxu0
        %v2832 = vadd.f32 0.0, %v2831
        %2833 = vmatmul.f32.gmra.mxu0 %v2670
        %v2834 = vpop.f32.mrf.mxu0
        %v2835 = vadd.f32 0.0, %v2834
        %2836 = vmatmul.f32.gmra.mxu0 %v2673
        %v2837 = vpop.f32.mrf.mxu0
        %v2838 = vadd.f32 0.0, %v2837
        %2839 = vmatmul.f32.gmra.mxu0 %v2676
        %v2840 = vpop.f32.mrf.mxu0
        %v2841 = vadd.f32 0.0, %v2840
        %2842 = vmatmul.f32.gmra.mxu0 %v2679
        %v2843 = vpop.f32.mrf.mxu0
        %v2844 = vadd.f32 0.0, %v2843
        %2845 = vmatmul.f32.gmra.mxu0 %v2682
        %v2846 = vpop.f32.mrf.mxu0
        %v2847 = vadd.f32 0.0, %v2846
        %2848 = vmatmul.f32.gmra.mxu0 %v2685
        %v2849 = vpop.f32.mrf.mxu0
        %v2850 = vadd.f32 0.0, %v2849
        %2851 = vmatmul.f32.gmra.mxu0 %v2688
        %v2852 = vpop.f32.mrf.mxu0
        %v2853 = vadd.f32 0.0, %v2852
        %2854 = vmatmul.f32.gmra.mxu0 %v2691
        %v2855 = vpop.f32.mrf.mxu0
        %v2856 = vadd.f32 0.0, %v2855
        %2857 = vmatmul.f32.gmra.mxu0 %v2694
        %v2858 = vpop.f32.mrf.mxu0
        %v2859 = vadd.f32 0.0, %v2858
        %2860 = vmatmul.f32.gmra.mxu0 %v2697
        %v2861 = vpop.f32.mrf.mxu0
        %v2862 = vadd.f32 0.0, %v2861
        %2863 = vmatmul.f32.gmra.mxu0 %v2700
        %v2864 = vpop.f32.mrf.mxu0
        %v2865 = vadd.f32 0.0, %v2864
        %2866 = vmatmul.f32.gmra.mxu0 %v2703
        %v2867 = vpop.f32.mrf.mxu0
        %v2868 = vadd.f32 0.0, %v2867
        %2869 = vmatmul.f32.gmra.mxu0 %v2706
        %v2870 = vpop.f32.mrf.mxu0
        %v2871 = vadd.f32 0.0, %v2870
        %2872 = vmatmul.f32.gmra.mxu0 %v2709
        %v2873 = vpop.f32.mrf.mxu0
        %v2874 = vadd.f32 0.0, %v2873
        %2875 = vmatmul.f32.gmra.mxu0 %v2712
        %v2876 = vpop.f32.mrf.mxu0
        %v2877 = vadd.f32 0.0, %v2876
        %2878 = vmatmul.f32.gmra.mxu0 %v2715
        %v2879 = vpop.f32.mrf.mxu0
        %v2880 = vadd.f32 0.0, %v2879
        %2881 = vmatmul.f32.gmra.mxu0 %v2718
        %v2882 = vpop.f32.mrf.mxu0
        %v2883 = vadd.f32 0.0, %v2882
        %2884 = vmatmul.f32.gmra.mxu0 %v2721
        %v2885 = vpop.f32.mrf.mxu0
        %v2886 = vadd.f32 0.0, %v2885
        %2887 = vmatmul.f32.gmra.mxu0 %v2724
        %v2888 = vpop.f32.mrf.mxu0
        %v2889 = vadd.f32 0.0, %v2888
        %2890 = vmatmul.f32.gmra.mxu0 %v2727
        %v2891 = vpop.f32.mrf.mxu0
        %v2892 = vadd.f32 0.0, %v2891
        %2893 = vmatmul.f32.gmra.mxu0 %v2730
        %v2894 = vpop.f32.mrf.mxu0
        %v2895 = vadd.f32 0.0, %v2894
        %2896 = vmatmul.f32.gmra.mxu0 %v2733
        %v2897 = vpop.f32.mrf.mxu0
        %v2898 = vadd.f32 0.0, %v2897
        %2899 = vmatmul.f32.gmra.mxu0 %v2736
        %v2900 = vpop.f32.mrf.mxu0
        %v2901 = vadd.f32 0.0, %v2900
        %2902 = vmatmul.f32.gmra.mxu0 %v2739
        %v2903 = vpop.f32.mrf.mxu0
        %v2904 = vadd.f32 0.0, %v2903
        %2905 = vmatmul.f32.gmra.mxu0 %v2742
        %v2906 = vpop.f32.mrf.mxu0
        %v2907 = vadd.f32 0.0, %v2906
        %2908 = vmatmul.f32.gmra.mxu0 %v2745
        %v2909 = vpop.f32.mrf.mxu0
        %v2910 = vadd.f32 0.0, %v2909
        %2911 = vmatmul.f32.gmra.mxu0 %v2748
        %v2912 = vpop.f32.mrf.mxu0
        %v2913 = vadd.f32 0.0, %v2912
        %2914 = vmatmul.f32.gmra.mxu0 %v2751
        %v2915 = vpop.f32.mrf.mxu0
        %v2916 = vadd.f32 0.0, %v2915
        %2917 = vmatmul.f32.gmra.mxu0 %v2754
        %v2918 = vpop.f32.mrf.mxu0
        %v2919 = vadd.f32 0.0, %v2918
        %2920 = vmatmul.f32.gmra.mxu0 %v2757
        %v2921 = vpop.f32.mrf.mxu0
        %v2922 = vadd.f32 0.0, %v2921
        %2923 = vmatmul.f32.gmra.mxu0 %v2760
        %v2924 = vpop.f32.mrf.mxu0
        %v2925 = vadd.f32 0.0, %v2924
        %2926 = vmatmul.f32.gmra.mxu0 %v2763
        %v2927 = vpop.f32.mrf.mxu0
        %v2928 = vadd.f32 0.0, %v2927
        %2929 = vmatmul.f32.gmra.mxu0 %v2766
        %v2930 = vpop.f32.mrf.mxu0
        %v2931 = vadd.f32 0.0, %v2930
        %2932 = vmatmul.f32.gmra.mxu0 %v2769
        %v2933 = vpop.f32.mrf.mxu0
        %v2934 = vadd.f32 0.0, %v2933
        %2935 = vmatmul.f32.gmra.mxu0 %v2772
        %v2936 = vpop.f32.mrf.mxu0
        %v2937 = vadd.f32 0.0, %v2936
        %2938 = vmatmul.f32.gmra.mxu0 %v2775
        %v2939 = vpop.f32.mrf.mxu0
        %v2940 = vadd.f32 0.0, %v2939
        %2941 = vmatmul.f32.gmra.mxu0 %v2778
        %v2942 = vpop.f32.mrf.mxu0
        %v2943 = vadd.f32 0.0, %v2942
        %2944 = vmatmul.f32.gmra.mxu0 %v2781
        %v2945 = vpop.f32.mrf.mxu0
        %v2946 = vadd.f32 0.0, %v2945
        %2947 = vmatmul.f32.gmra.mxu0 %v2784
        %v2948 = vpop.f32.mrf.mxu0
        %v2949 = vadd.f32 0.0, %v2948
        %2950 = vdwg.mxu0
        %2951 = vst [vmem:[%s194] sm:$0xff] %v2808
        %2952 = vst [vmem:[%s194 + $0x8] sm:$0xff] %v2811
        %2953 = vst [vmem:[%s194 + $0x10] sm:$0xff] %v2814
        %2954 = vst [vmem:[%s194 + $0x18] sm:$0xff] %v2817
        %2955 = vst [vmem:[%s194 + $0x20] sm:$0xff] %v2820
        %2956 = vst [vmem:[%s194 + $0x28] sm:$0xff] %v2823
        %2957 = vst [vmem:[%s194 + $0x30] sm:$0xff] %v2826
        %2958 = vst [vmem:[%s194 + $0x38] sm:$0xff] %v2829
        %2959 = vst [vmem:[%s194 + $0x40] sm:$0xff] %v2832
        %2960 = vst [vmem:[%s194 + $0x48] sm:$0xff] %v2835
        %2961 = vst [vmem:[%s194 + $0x50] sm:$0xff] %v2838
        %2962 = vst [vmem:[%s194 + $0x58] sm:$0xff] %v2841
        %2963 = vst [vmem:[%s194 + $0x60] sm:$0xff] %v2844
        %2964 = vst [vmem:[%s194 + $0x68] sm:$0xff] %v2847
        %2965 = vst [vmem:[%s194 + $0x70] sm:$0xff] %v2850
        %2966 = vst [vmem:[%s194 + $0x78] sm:$0xff] %v2853
        %2967 = vst [vmem:[%s194 + $0x80] sm:$0xff] %v2856
        %2968 = vst [vmem:[%s194 + $0x88] sm:$0xff] %v2859
        %2969 = vst [vmem:[%s194 + $0x90] sm:$0xff] %v2862
        %2970 = vst [vmem:[%s194 + $0x98] sm:$0xff] %v2865
        %2971 = vst [vmem:[%s194 + $0xa0] sm:$0xff] %v2868
        %2972 = vst [vmem:[%s194 + $0xa8] sm:$0xff] %v2871
        %2973 = vst [vmem:[%s194 + $0xb0] sm:$0xff] %v2874
        %2974 = vst [vmem:[%s194 + $0xb8] sm:$0xff] %v2877
        %2975 = vst [vmem:[%s194 + $0xc0] sm:$0xff] %v2880
        %2976 = vst [vmem:[%s194 + $0xc8] sm:$0xff] %v2883
        %2977 = vst [vmem:[%s194 + $0xd0] sm:$0xff] %v2886
        %2978 = vst [vmem:[%s194 + $0xd8] sm:$0xff] %v2889
        %2979 = vst [vmem:[%s194 + $0xe0] sm:$0xff] %v2892
        %2980 = vst [vmem:[%s194 + $0xe8] sm:$0xff] %v2895
        %2981 = vst [vmem:[%s194 + $0xf0] sm:$0xff] %v2898
        %2982 = vst [vmem:[%s194 + $0xf8] sm:$0xff] %v2901
        %2983 = vst [vmem:[%s194 + $0x100] sm:$0xff] %v2904
        %2984 = vst [vmem:[%s194 + $0x108] sm:$0xff] %v2907
        %2985 = vst [vmem:[%s194 + $0x110] sm:$0xff] %v2910
        %2986 = vst [vmem:[%s194 + $0x118] sm:$0xff] %v2913
        %2987 = vst [vmem:[%s194 + $0x120] sm:$0xff] %v2916
        %2988 = vst [vmem:[%s194 + $0x128] sm:$0xff] %v2919
        %2989 = vst [vmem:[%s194 + $0x130] sm:$0xff] %v2922
        %2990 = vst [vmem:[%s194 + $0x138] sm:$0xff] %v2925
        %2991 = vst [vmem:[%s194 + $0x140] sm:$0xff] %v2928
        %2992 = vst [vmem:[%s194 + $0x148] sm:$0xff] %v2931
        %2993 = vst [vmem:[%s194 + $0x150] sm:$0xff] %v2934
        %2994 = vst [vmem:[%s194 + $0x158] sm:$0xff] %v2937
        %2995 = vst [vmem:[%s194 + $0x160] sm:$0xff] %v2940
        %2996 = vst [vmem:[%s194 + $0x168] sm:$0xff] %v2943
        %2997 = vst [vmem:[%s194 + $0x170] sm:$0xff] %v2946
        %2998 = vst [vmem:[%s194 + $0x178] sm:$0xff] %v2949
        %v2999 = vlaneseq
        %v3000 = vshrl.u32 %v2999, 7
        %v3001 = vadd.s32 %v3000, 8
        %v3002 = vadd.s32 %v3000, 16
        %vm3003 = vcmp.lt.s32.totalorder %v3000, 16
        %vm3004 = vcmp.lt.s32.totalorder %v3001, 16
        %vm3005 = vcmp.lt.s32.totalorder %v3002, 16
        %v3006 = vsel %vm3003, 1, 0
        %v3007 = vsel %vm3004, 1, 0
        %v3008 = vsel %vm3005, 1, 0
        %v3009 = vcvt.s32.f32 %v3006
        %v3010 = vcvt.s32.f32 %v3007
        %v3011 = vcvt.s32.f32 %v3008
        %v3012 = vmul.f32 %v2808, %v3009
        %v3013 = vmul.f32 %v2811, %v3010
        %v3014 = vmul.f32 %v2814, %v3011
        %v3015 = vmul.f32 %v2817, %v3009
        %v3016 = vmul.f32 %v2820, %v3010
        %v3017 = vmul.f32 %v2823, %v3011
        %v3018 = vmul.f32 %v2826, %v3009
        %v3019 = vmul.f32 %v2829, %v3010
        %v3020 = vmul.f32 %v2832, %v3011
        %v3021 = vmul.f32 %v2835, %v3009
        %v3022 = vmul.f32 %v2838, %v3010
        %v3023 = vmul.f32 %v2841, %v3011
        %v3024 = vmul.f32 %v2844, %v3009
        %v3025 = vmul.f32 %v2847, %v3010
        %v3026 = vmul.f32 %v2850, %v3011
        %v3027 = vmul.f32 %v2853, %v3009
        %v3028 = vmul.f32 %v2856, %v3010
        %v3029 = vmul.f32 %v2859, %v3011
        %v3030 = vmul.f32 %v2862, %v3009
        %v3031 = vmul.f32 %v2865, %v3010
        %v3032 = vmul.f32 %v2868, %v3011
        %v3033 = vmul.f32 %v2871, %v3009
        %v3034 = vmul.f32 %v2874, %v3010
        %v3035 = vmul.f32 %v2877, %v3011
        %v3036 = vmul.f32 %v2880, %v3009
        %v3037 = vmul.f32 %v2883, %v3010
        %v3038 = vmul.f32 %v2886, %v3011
        %v3039 = vmul.f32 %v2889, %v3009
        %v3040 = vmul.f32 %v2892, %v3010
        %v3041 = vmul.f32 %v2895, %v3011
        %v3042 = vmul.f32 %v2898, %v3009
        %v3043 = vmul.f32 %v2901, %v3010
        %v3044 = vmul.f32 %v2904, %v3011
        %v3045 = vmul.f32 %v2907, %v3009
        %v3046 = vmul.f32 %v2910, %v3010
        %v3047 = vmul.f32 %v2913, %v3011
        %v3048 = vmul.f32 %v2916, %v3009
        %v3049 = vmul.f32 %v2919, %v3010
        %v3050 = vmul.f32 %v2922, %v3011
        %v3051 = vmul.f32 %v2925, %v3009
        %v3052 = vmul.f32 %v2928, %v3010
        %v3053 = vmul.f32 %v2931, %v3011
        %v3054 = vmul.f32 %v2934, %v3009
        %v3055 = vmul.f32 %v2937, %v3010
        %v3056 = vmul.f32 %v2940, %v3011
        %v3057 = vmul.f32 %v2943, %v3009
        %v3058 = vmul.f32 %v2946, %v3010
        %v3059 = vmul.f32 %v2949, %v3011
        %v3060 = vadd.f32 %v3012, %v3013
        %v3061 = vadd.f32 %v3060, %v3014
        %v3062 = vadd.f32 %v3061, %v3015
        %v3063 = vadd.f32 %v3062, %v3016
        %v3064 = vadd.f32 %v3063, %v3017
        %v3065 = vadd.f32 %v3064, %v3018
        %v3066 = vadd.f32 %v3065, %v3019
        %v3067 = vadd.f32 %v3066, %v3020
        %v3068 = vadd.f32 %v3067, %v3021
        %v3069 = vadd.f32 %v3068, %v3022
        %v3070 = vadd.f32 %v3069, %v3023
        %v3071 = vadd.f32 %v3070, %v3024
        %v3072 = vadd.f32 %v3071, %v3025
        %v3073 = vadd.f32 %v3072, %v3026
        %v3074 = vadd.f32 %v3073, %v3027
        %v3075 = vadd.f32 %v3074, %v3028
        %v3076 = vadd.f32 %v3075, %v3029
        %v3077 = vadd.f32 %v3076, %v3030
        %v3078 = vadd.f32 %v3077, %v3031
        %v3079 = vadd.f32 %v3078, %v3032
        %v3080 = vadd.f32 %v3079, %v3033
        %v3081 = vadd.f32 %v3080, %v3034
        %v3082 = vadd.f32 %v3081, %v3035
        %v3083 = vadd.f32 %v3082, %v3036
        %v3084 = vadd.f32 %v3083, %v3037
        %v3085 = vadd.f32 %v3084, %v3038
        %v3086 = vadd.f32 %v3085, %v3039
        %v3087 = vadd.f32 %v3086, %v3040
        %v3088 = vadd.f32 %v3087, %v3041
        %v3089 = vadd.f32 %v3088, %v3042
        %v3090 = vadd.f32 %v3089, %v3043
        %v3091 = vadd.f32 %v3090, %v3044
        %v3092 = vadd.f32 %v3091, %v3045
        %v3093 = vadd.f32 %v3092, %v3046
        %v3094 = vadd.f32 %v3093, %v3047
        %v3095 = vadd.f32 %v3094, %v3048
        %v3096 = vadd.f32 %v3095, %v3049
        %v3097 = vadd.f32 %v3096, %v3050
        %v3098 = vadd.f32 %v3097, %v3051
        %v3099 = vadd.f32 %v3098, %v3052
        %v3100 = vadd.f32 %v3099, %v3053
        %v3101 = vadd.f32 %v3100, %v3054
        %v3102 = vadd.f32 %v3101, %v3055
        %v3103 = vadd.f32 %v3102, %v3056
        %v3104 = vadd.f32 %v3103, %v3057
        %v3105 = vadd.f32 %v3104, %v3058
        %v3106 = vadd.f32 %v3105, %v3059
        %v3107 = vrot.slane %v3106, 4
        %v3108 = vadd.f32 %v3106, %v3107
        %v3109 = vrot.slane %v3108, 2
        %v3110 = vadd.f32 %v3108, %v3109
        %v3111 = vrot.slane %v3110, 1
        %v3112 = vadd.f32 %v3110, %v3111
        %3113 = vst [vmem:[%s200] sm:$0x1] %v3112
        %v3114 = vmul.f32 %v3012, %v2808
        %v3115 = vmul.f32 %v3013, %v2811
        %v3116 = vmul.f32 %v3014, %v2814
        %v3117 = vmul.f32 %v3015, %v2817
        %v3118 = vmul.f32 %v3016, %v2820
        %v3119 = vmul.f32 %v3017, %v2823
        %v3120 = vmul.f32 %v3018, %v2826
        %v3121 = vmul.f32 %v3019, %v2829
        %v3122 = vmul.f32 %v3020, %v2832
        %v3123 = vmul.f32 %v3021, %v2835
        %v3124 = vmul.f32 %v3022, %v2838
        %v3125 = vmul.f32 %v3023, %v2841
        %v3126 = vmul.f32 %v3024, %v2844
        %v3127 = vmul.f32 %v3025, %v2847
        %v3128 = vmul.f32 %v3026, %v2850
        %v3129 = vmul.f32 %v3027, %v2853
        %v3130 = vmul.f32 %v3028, %v2856
        %v3131 = vmul.f32 %v3029, %v2859
        %v3132 = vmul.f32 %v3030, %v2862
        %v3133 = vmul.f32 %v3031, %v2865
        %v3134 = vmul.f32 %v3032, %v2868
        %v3135 = vmul.f32 %v3033, %v2871
        %v3136 = vmul.f32 %v3034, %v2874
        %v3137 = vmul.f32 %v3035, %v2877
        %v3138 = vmul.f32 %v3036, %v2880
        %v3139 = vmul.f32 %v3037, %v2883
        %v3140 = vmul.f32 %v3038, %v2886
        %v3141 = vmul.f32 %v3039, %v2889
        %v3142 = vmul.f32 %v3040, %v2892
        %v3143 = vmul.f32 %v3041, %v2895
        %v3144 = vmul.f32 %v3042, %v2898
        %v3145 = vmul.f32 %v3043, %v2901
        %v3146 = vmul.f32 %v3044, %v2904
        %v3147 = vmul.f32 %v3045, %v2907
        %v3148 = vmul.f32 %v3046, %v2910
        %v3149 = vmul.f32 %v3047, %v2913
        %v3150 = vmul.f32 %v3048, %v2916
        %v3151 = vmul.f32 %v3049, %v2919
        %v3152 = vmul.f32 %v3050, %v2922
        %v3153 = vmul.f32 %v3051, %v2925
        %v3154 = vmul.f32 %v3052, %v2928
        %v3155 = vmul.f32 %v3053, %v2931
        %v3156 = vmul.f32 %v3054, %v2934
        %v3157 = vmul.f32 %v3055, %v2937
        %v3158 = vmul.f32 %v3056, %v2940
        %v3159 = vmul.f32 %v3057, %v2943
        %v3160 = vmul.f32 %v3058, %v2946
        %v3161 = vmul.f32 %v3059, %v2949
        %v3162 = vadd.f32 %v3114, %v3115
        %v3163 = vadd.f32 %v3162, %v3116
        %v3164 = vadd.f32 %v3163, %v3117
        %v3165 = vadd.f32 %v3164, %v3118
        %v3166 = vadd.f32 %v3165, %v3119
        %v3167 = vadd.f32 %v3166, %v3120
        %v3168 = vadd.f32 %v3167, %v3121
        %v3169 = vadd.f32 %v3168, %v3122
        %v3170 = vadd.f32 %v3169, %v3123
        %v3171 = vadd.f32 %v3170, %v3124
        %v3172 = vadd.f32 %v3171, %v3125
        %v3173 = vadd.f32 %v3172, %v3126
        %v3174 = vadd.f32 %v3173, %v3127
        %v3175 = vadd.f32 %v3174, %v3128
        %v3176 = vadd.f32 %v3175, %v3129
        %v3177 = vadd.f32 %v3176, %v3130
        %v3178 = vadd.f32 %v3177, %v3131
        %v3179 = vadd.f32 %v3178, %v3132
        %v3180 = vadd.f32 %v3179, %v3133
        %v3181 = vadd.f32 %v3180, %v3134
        %v3182 = vadd.f32 %v3181, %v3135
        %v3183 = vadd.f32 %v3182, %v3136
        %v3184 = vadd.f32 %v3183, %v3137
        %v3185 = vadd.f32 %v3184, %v3138
        %v3186 = vadd.f32 %v3185, %v3139
        %v3187 = vadd.f32 %v3186, %v3140
        %v3188 = vadd.f32 %v3187, %v3141
        %v3189 = vadd.f32 %v3188, %v3142
        %v3190 = vadd.f32 %v3189, %v3143
        %v3191 = vadd.f32 %v3190, %v3144
        %v3192 = vadd.f32 %v3191, %v3145
        %v3193 = vadd.f32 %v3192, %v3146
        %v3194 = vadd.f32 %v3193, %v3147
        %v3195 = vadd.f32 %v3194, %v3148
        %v3196 = vadd.f32 %v3195, %v3149
        %v3197 = vadd.f32 %v3196, %v3150
        %v3198 = vadd.f32 %v3197, %v3151
        %v3199 = vadd.f32 %v3198, %v3152
        %v3200 = vadd.f32 %v3199, %v3153
        %v3201 = vadd.f32 %v3200, %v3154
        %v3202 = vadd.f32 %v3201, %v3155
        %v3203 = vadd.f32 %v3202, %v3156
        %v3204 = vadd.f32 %v3203, %v3157
        %v3205 = vadd.f32 %v3204, %v3158
        %v3206 = vadd.f32 %v3205, %v3159
        %v3207 = vadd.f32 %v3206, %v3160
        %v3208 = vadd.f32 %v3207, %v3161
        %v3209 = vrot.slane %v3208, 4
        %v3210 = vadd.f32 %v3208, %v3209
        %v3211 = vrot.slane %v3210, 2
        %v3212 = vadd.f32 %v3210, %v3211
        %v3213 = vrot.slane %v3212, 1
        %v3214 = vadd.f32 %v3212, %v3213
        %3215 = vst [vmem:[%s206] sm:$0x1] %v3214
        %s3216 = sand.u32 %s77, 1
        %s3217 = scalar_lea.sflag [#allocation3], %s3216
        %s3218 = sand.u32 %s77, 1
        %s3219 = smul.addr %s3218, 384
        %s3220 = scalar_lea.vmem [#allocation2], %s3219
        %s3221 = sand.u32 %s22, 1
        %s3222 = scalar_lea.sflag [#allocation5], %s3221
        %s3223 = sand.u32 %s103, 1
        %s3224 = scalar_lea.vmem [#allocation4], %s3223
        %s3225 = sand.u32 %s22, 1
        %s3226 = scalar_lea.sflag [#allocation5], %s3225
        %s3227 = sand.u32 %s129, 1
        %s3228 = scalar_lea.vmem [#allocation6], %s3227
        // Predicated region
        $region29: #{tpu_custom_call.1} parent=27 // pred_check
          %p3229 = pneg %p87
        $region30: #{tpu_custom_call.1} parent=27 // pred_check_branch
          %3231 = sbr.rel (%p3229) target = $region32
        $region31: #{tpu_custom_call.1} parent=27 // pred_region
          %3233 = vsyncadd %s3217, 0
          %s3234 = smul.addr %s22, 48
          %s3235 = smul.addr %s3234, 8
          %s3236 = scalar_lea.hbm %s2, %s3235
          %s3237 = sshll.u32 %s3220, 4
          %s3238 = int_to_ptr.vmem [resolvable:$true] %s3237
          %s3239 = sshll.u32 %s3236, 4
          %s3240 = int_to_ptr.hbm [resolvable:$true] %s3239
          %3245 = dma.vmem_to_hbm [thread:$0]  %s3238, 6144, %s3240, %s3217, 128, 128, 8
        $region32: #{tpu_custom_call.1} parent=27 // pred_fallthru
          _
        // Predicated region
        $region33: #{tpu_custom_call.1} parent=27 // pred_check
          %p3246 = pneg %p113
        $region34: #{tpu_custom_call.1} parent=27 // pred_check_branch
          %3248 = sbr.rel (%p3246) target = $region36
        $region35: #{tpu_custom_call.1} parent=27 // pred_region
          %3250 = vsyncadd %s3222, 0
          %s3251 = scalar_lea.hbm %s3, %s22
          %s3253 = sshll.u32 %s3224, 4
          %s3254 = int_to_ptr.vmem [resolvable:$true] %s3253
          %s3255 = sshll.u32 %s3251, 4
          %s3256 = int_to_ptr.hbm [resolvable:$true] %s3255
          %3258 = dma.vmem_to_hbm [thread:$0]  %s3254, 16, %s3256, %s3222
        $region36: #{tpu_custom_call.1} parent=27 // pred_fallthru
          _
        // Predicated region
        $region37: #{tpu_custom_call.1} parent=27 // pred_check
          %p3259 = pneg %p139
        $region38: #{tpu_custom_call.1} parent=27 // pred_check_branch
          %3261 = sbr.rel (%p3259) target = $region40
        $region39: #{tpu_custom_call.1} parent=27 // pred_region
          %3263 = vsyncadd %s3226, 0
          %s3264 = scalar_lea.hbm %s4, %s22
          %s3266 = sshll.u32 %s3228, 4
          %s3267 = int_to_ptr.vmem [resolvable:$true] %s3266
          %s3268 = sshll.u32 %s3264, 4
          %s3269 = int_to_ptr.hbm [resolvable:$true] %s3268
          %3271 = dma.vmem_to_hbm [thread:$0]  %s3267, 16, %s3269, %s3226
        $region40: #{tpu_custom_call.1} parent=27 // pred_fallthru
          _
      $region28: #{tpu_custom_call.1} parent=5 // pred_fallthru
        _
      %p3272 = scmp.le.s32.totalorder 2, %s17
      // Predicated region
      $region41: #{tpu_custom_call.1} parent=5 // pred_check
        %p3273 = pneg %p3272
      $region42: #{tpu_custom_call.1} parent=5 // pred_check_branch
        %3275 = sbr.rel (%p3273) target = $region44
      $region43: #{tpu_custom_call.1} parent=5 // pred_region
        %s3276 = ssub.s32 %s17, 2
        // Predicated region
        $region45: #{tpu_custom_call.1} parent=43 // pred_check
          %p3277 = pneg %p93
        $region46: #{tpu_custom_call.1} parent=43 // pred_check_branch
          %3279 = sbr.rel (%p3277) target = $region48
        $region47: #{tpu_custom_call.1} parent=43 // pred_region
          %s3280 = sand.u32 %s78, 1
          %s3281 = scalar_lea.sflag [#allocation3], %s3280
          %s3282 = sand.u32 %s78, 1
          %s3283 = smul.addr %s3282, 384
          %s3284 = scalar_lea.vmem [#allocation2], %s3283
          %3286 = dma.done %s3281, 6144
        $region48: #{tpu_custom_call.1} parent=43 // pred_fallthru
          _
        // Predicated region
        $region49: #{tpu_custom_call.1} parent=43 // pred_check
          %p3287 = pneg %p119
        $region50: #{tpu_custom_call.1} parent=43 // pred_check_branch
          %3289 = sbr.rel (%p3287) target = $region52
        $region51: #{tpu_custom_call.1} parent=43 // pred_region
          %s3290 = sand.u32 %s23, 1
          %s3291 = scalar_lea.sflag [#allocation5], %s3290
          %s3292 = sand.u32 %s104, 1
          %s3293 = scalar_lea.vmem [#allocation4], %s3292
          %3295 = dma.done %s3291, 16
        $region52: #{tpu_custom_call.1} parent=43 // pred_fallthru
          _
        // Predicated region
        $region53: #{tpu_custom_call.1} parent=43 // pred_check
          %p3296 = pneg %p145
        $region54: #{tpu_custom_call.1} parent=43 // pred_check_branch
          %3298 = sbr.rel (%p3296) target = $region56
        $region55: #{tpu_custom_call.1} parent=43 // pred_region
          %s3299 = sand.u32 %s23, 1
          %s3300 = scalar_lea.sflag [#allocation5], %s3299
          %s3301 = sand.u32 %s130, 1
          %s3302 = scalar_lea.vmem [#allocation6], %s3301
          %3304 = dma.done %s3300, 16
        $region56: #{tpu_custom_call.1} parent=43 // pred_fallthru
          _
      $region44: #{tpu_custom_call.1} parent=5 // pred_fallthru
        _
    $region6: #{tpu_custom_call.1} parent=1 // loop_footer
      %s21 = sadd.s32 1, %s17
    $region7: #{tpu_custom_call.1} parent=1 // loop_footer_branch
      %16 = sbr.rel target = $region3
    $region8: #{tpu_custom_call.1} parent=1 // loop_exit
      _
    %3305 = vsyncpa [#allocation3], 1
    %s3306 = scalar_lea.sflag [#allocation3], 1
    %3307 = vsyncpa %s3306, 1
    %3308 = vsyncpa [#allocation5], 1
    %s3309 = scalar_lea.sflag [#allocation5], 1
    %3310 = vsyncpa %s3309, 1

</llo_original>
